<compile_context>
chip_gen: v6e
topology: v6e:2x2x1
jax: 0.10.0
libtpu: 0.0.40
codegen_flags: <defaults>
</compile_context>

<pallas_src>
import functools

import jax
import jax.numpy as jnp
from jax.experimental import pallas as pl
from jax.experimental.pallas import tpu as pltpu

BN_EPS = 1e-5
PRELU_A = 0.25  # PyTorch nn.PReLU() default init


# ---------------------------------------------------------------------------
# Pallas kernel: one grid step handles tile_n batch elements, each as its own
# (C, Lo) slab.  No wrapper preprocessing; no in-kernel concatenations.
# ---------------------------------------------------------------------------
def _encoder_kernel(C, K, S, L, Lo, tile_n, mxu_dtype, x_ref, p_ref, o_ref):
    f32 = jnp.float32
    md = mxu_dtype

    # ---- parameter views: static Ref slices (zero-cost), rows are C-aligned
    wks = [p_ref[k * C:(k + 1) * C, :].astype(md) for k in range(K)]   # K x (C, C)
    w1 = p_ref[K * C:(K + 2) * C, :].astype(md)                        # (2C, C)
    w2 = p_ref[(K + 2) * C:(K + 4) * C, :].astype(md)                  # (2C, C)
    dpb = p_ref[(K + 4) * C:(K + 5) * C, :].astype(f32)                # (C, C)
    dw0, dw1, dw2 = dpb[:, 0:1], dpb[:, 1:2], dpb[:, 2:3]              # dw taps
    a_col = dpb[:, 3:4]                                                # PReLU slope
    bdw = dpb[:, 4:5]                                                  # depthwise bias
    bdc = dpb[:, 5:6]                                                  # down_conv bias
    bb = p_ref[(K + 5) * C:(K + 7) * C, :].astype(f32)                 # (2C, C)
    b1, b2 = bb[:, 0:1], bb[:, 1:2]

    # ---- strided-conv gather as 0/1 selection matmuls (built once, shared
    #      across the batch loop).  Sel_k[j, t] = (j == t*S + k); the last
    #      needed row is (Lo-1)*S + K-1 = L-1, so no input padding is needed.
    row = jax.lax.broadcasted_iota(jnp.int32, (L, Lo), 0)
    col = jax.lax.broadcasted_iota(jnp.int32, (L, Lo), 1)
    sels = [(row == col * S + k).astype(md) for k in range(K)]

    # ---- depthwise-conv boundary masks (per-batch slab -> trivial masks) ---
    pos = jax.lax.broadcasted_iota(jnp.int32, (1, Lo), 1)
    left_ok = pos >= 1            # x[t-1] exists
    right_ok = pos <= Lo - 2      # x[t+1] exists

    for b in range(tile_n):
        xb = x_ref[b].astype(md)                                  # (C, L)

        # ---- down_conv: K accumulated matmuls + folded BN + ReLU ----------
        h = None
        for k in range(K):
            xk = jnp.dot(xb, sels[k], preferred_element_type=f32)  # (C, Lo)
            hk = jnp.dot(wks[k], xk.astype(md),
                         preferred_element_type=f32)               # (C, Lo)
            h = hk if h is None else h + hk
        h = jnp.maximum(h + bdc, 0.0)                               # (C, Lo)

        # ---- point_conv1: 1x1 conv C->2C + folded BN + GLU ----------------
        z1 = jnp.dot(w1, h.astype(md), preferred_element_type=f32) + b1
        g1 = z1[:C, :] * jax.nn.sigmoid(z1[C:, :])                  # (C, Lo)

        # ---- depth_conv: depthwise k=3, pad=1 + BN + PReLU ----------------
        g_m1 = jnp.where(left_ok, pltpu.roll(g1, 1, axis=1), 0.0)        # x[t-1]
        g_p1 = jnp.where(right_ok, pltpu.roll(g1, Lo - 1, axis=1), 0.0)  # x[t+1]
        d_ = dw0 * g_m1 + dw1 * g1 + dw2 * g_p1 + bdw
        d_ = jnp.maximum(d_, 0.0) + a_col * jnp.minimum(d_, 0.0)    # PReLU

        # ---- point_conv2: 1x1 conv C->2C + folded BN + GLU ----------------
        z2 = jnp.dot(w2, d_.astype(md), preferred_element_type=f32) + b2
        g2 = z2[:C, :] * jax.nn.sigmoid(z2[C:, :])                  # (C, Lo)

        # ---- residual + lane-dense (C, Lo) store --------------------------
        o_ref[b] = (g2 + h).astype(o_ref.dtype)


# ---------------------------------------------------------------------------
# Parameter packing: one (C*(K+7), C) f32 slab -> a single DMA operand.
# Row blocks (all C-aligned): K taps of W_k | w1 | w2 | {dw,a,bdw,bdc} | {b1,b2}
# ---------------------------------------------------------------------------
def _pack_params(params, C, K):
    wdc, bdc, w1, b1, dw, bdw, w2, b2, prelu_a = params
    assert C >= 6, "parameter slab packing needs at least 6 channels"
    R = C * (K + 7)
    P = jnp.zeros((R, C), jnp.float32)
    # rows k*C + o = wdc[o, :, k]  (per-tap weight matrices W_k)
    wk_stack = jnp.transpose(wdc, (2, 0, 1)).reshape(K * C, C)
    P = P.at[0:K * C, :].set(wk_stack)
    P = P.at[K * C:(K + 2) * C, :].set(w1)
    P = P.at[(K + 2) * C:(K + 4) * C, :].set(w2)
    P = P.at[(K + 4) * C:(K + 5) * C, 0:3].set(dw)
    P = P.at[(K + 4) * C:(K + 5) * C, 3].set(jnp.full((C,), prelu_a, jnp.float32))
    P = P.at[(K + 4) * C:(K + 5) * C, 4].set(bdw)
    P = P.at[(K + 4) * C:(K + 5) * C, 5].set(bdc)
    P = P.at[(K + 5) * C:(K + 7) * C, 0].set(b1)
    P = P.at[(K + 5) * C:(K + 7) * C, 1].set(b2)
    return P


# ---------------------------------------------------------------------------
# Wrapper: no HBM pre-pass; raw (N, C, L) goes straight into the kernel.
# n_tiles=1 for small batches (per-step overhead dominates); n_tiles>1 only
# when each grid step / TensorCore gets meaningful work (v7x dual-TC,
# v5e DMA/compute pipelining with ~0.5-2 MB input blocks).
# mxu_dtype=jnp.bfloat16 halves matmul-operand vreg traffic on v6e/v7x
# (keep f32 on v5e: no bf16 VPU there); default f32 preserves exact numerics.
# ---------------------------------------------------------------------------
def encoder_forward(x, params, *, kernel_size, stride, n_tiles=1,
                    mxu_dtype=jnp.float32):
    N, C, L = x.shape
    K, S = kernel_size, stride
    assert L >= K
    Lo = (L - K) // S + 1
    # Lane-dense output stores need Lo % 128 == 0 (true for the target config);
    # otherwise pad the out_spec last dim to 128 to keep stores unmasked.
    assert N % n_tiles == 0
    tile_n = N // n_tiles

    P = _pack_params(params, C, K)
    kern = functools.partial(_encoder_kernel, C, K, S, L, Lo, tile_n, mxu_dtype)

    return pl.pallas_call(
        kern,
        out_shape=jax.ShapeDtypeStruct((N, C, Lo), x.dtype),
        grid=(n_tiles,),
        in_specs=[
            pl.BlockSpec((tile_n, C, L), lambda i: (i, 0, 0)),         # raw input
            pl.BlockSpec((C * (K + 7), C), lambda i: (0, 0)),          # params
        ],
        out_specs=pl.BlockSpec((tile_n, C, Lo), lambda i: (i, 0, 0)),
        compiler_params=pltpu.CompilerParams(
            dimension_semantics=(("parallel",) if n_tiles > 1 else ("arbitrary",))),
    )(x, P)


# ---------------------------------------------------------------------------
# Deterministic parameter init + BN folding (inference mode).
# ---------------------------------------------------------------------------
def _fold_bn(w, b, gamma, beta, mean, var, eps=BN_EPS):
    s = gamma / jnp.sqrt(var + eps)
    w_eff = w * s.reshape((-1,) + (1,) * (w.ndim - 1))
    b_eff = s * (b - mean) + beta
    return w_eff.astype(jnp.float32), b_eff.astype(jnp.float32)


def init_params(key, C, K):
    keys = iter(jax.random.split(key, 32))

    def w(shape, scale=0.1):
        return scale * jax.random.normal(next(keys), shape, jnp.float32)

    def bn(c):
        gamma = 1.0 + 0.1 * jax.random.normal(next(keys), (c,), jnp.float32)
        beta = 0.1 * jax.random.normal(next(keys), (c,), jnp.float32)
        mean = 0.1 * jax.random.normal(next(keys), (c,), jnp.float32)
        var = 1.0 + 0.1 * jnp.abs(jax.random.normal(next(keys), (c,), jnp.float32))
        return gamma, beta, mean, var

    wdc, bdc = _fold_bn(w((C, C, K)), w((C,)), *bn(C))           # down_conv
    w1, b1 = _fold_bn(w((2 * C, C)), w((2 * C,)), *bn(2 * C))    # point_conv1
    dw, bdw = _fold_bn(w((C, 3)), w((C,)), *bn(C))               # depth_conv
    w2, b2 = _fold_bn(w((2 * C, C)), w((2 * C,)), *bn(2 * C))    # point_conv2
    return (wdc, bdc, w1, b1, dw, bdw, w2, b2, PRELU_A)


# ---------------------------------------------------------------------------
# Pure-JAX reference of the same (folded) math, for verification.
# ---------------------------------------------------------------------------
def encoder_reference(x, params, *, kernel_size, stride):
    wdc, bdc, w1, b1, dw, bdw, w2, b2, a = params
    N, C, L = x.shape
    K, S = kernel_size, stride
    Lo = (L - K) // S + 1
    hi = jax.lax.Precision.HIGHEST

    idx = (jnp.arange(Lo) * S)[None, :] + jnp.arange(K)[:, None]    # (K, Lo)
    xcol = x[:, :, idx]                                             # (N, C, K, Lo)
    h = jnp.einsum("ock,nckt->not", wdc, xcol, precision=hi) + bdc[None, :, None]
    h = jnp.maximum(h, 0.0)

    z1 = jnp.einsum("oc,nct->not", w1, h, precision=hi) + b1[None, :, None]
    g1 = z1[:, :C] * jax.nn.sigmoid(z1[:, C:])

    pad = jnp.pad(g1, ((0, 0), (0, 0), (1, 1)))
    d = (dw[None, :, 0:1] * pad[:, :, :-2]
         + dw[None, :, 1:2] * pad[:, :, 1:-1]
         + dw[None, :, 2:3] * pad[:, :, 2:]
         + bdw[None, :, None])
    d = jnp.maximum(d, 0.0) + a * jnp.minimum(d, 0.0)

    z2 = jnp.einsum("oc,nct->not", w2, d, precision=hi) + b2[None, :, None]
    g2 = z2[:, :C] * jax.nn.sigmoid(z2[:, C:])
    return g2 + h


if __name__ == "__main__":
    # Encoder config (small): layer=0, depth=3 -> attention branch not taken.
    in_channels, out_channels = 8, 16
    kernel_size, stride = 4, 2
    segment_len, head = 64, 4      # attn-block args (unused: layer != depth-1)
    layer, depth = 0, 3

    N, L = 2, 258                  # -> output length Lo = 128
    key = jax.random.PRNGKey(0)
    kx, kp = jax.random.split(key)
    x = jax.random.normal(kx, (N, in_channels, L), jnp.float32)
    params = init_params(kp, in_channels, kernel_size)

    Lo = (L - kernel_size) // stride + 1
    ref = encoder_reference(x, params, kernel_size=kernel_size, stride=stride)

    # Single grid step (small-batch config: per-step overhead dominates).
    fwd1 = jax.jit(functools.partial(
        encoder_forward, kernel_size=kernel_size, stride=stride, n_tiles=1))
    out1 = jax.block_until_ready(fwd1(x, params))
    assert out1.shape == (N, in_channels, Lo), out1.shape
    if not bool(jnp.allclose(out1, ref, atol=1e-3, rtol=1e-3)):
        raise AssertionError("Pallas kernel (n_tiles=1) does not match reference")

    # Grid over batch (v7x dual-TC / v5e-pipelining path) -- exercised for
    # correctness; only profitable once the batch is large enough.
    fwd2 = jax.jit(functools.partial(
        encoder_forward, kernel_size=kernel_size, stride=stride, n_tiles=2))
    out2 = jax.block_until_ready(fwd2(x, params))
    if not bool(jnp.allclose(out2, ref, atol=1e-3, rtol=1e-3)):
        raise AssertionError("Pallas kernel (n_tiles=2) does not match reference")

    print("KERNEL_OK")
</pallas_src>

<mosaic_0001>
module attributes {stable_mosaic.version = 11 : i64} {
  func.func @_encoder_kernel(%arg0: i32, %arg1: memref<2x8x258xf32, #tpu.memory_space<vmem>>, %arg2: memref<88x8xf32, #tpu.memory_space<vmem>>, %arg3: memref<2x8x128xf32, #tpu.memory_space<vmem>>) attributes {dimension_semantics = [#tpu.dimension_semantics<arbitrary>], iteration_bounds = array<i64: 1>, scalar_prefetch = 0 : i64, scratch_operands = 0 : i64, tpu.core_type = #tpu.core_type<tc>, window_params = [{transform_indices = @transform_0, window_bounds = array<i64: 2, 8, 258>}, {pipeline_mode = #tpu.pipeline_mode<synchronous>, transform_indices = @transform_1, window_bounds = array<i64: 88, 8>}, {transform_indices = @transform_2, window_bounds = array<i64: 2, 8, 128>}]} {
    %c0 = arith.constant 0 : index
    %c0_0 = arith.constant 0 : index
    %0 = vector.load %arg2[%c0, %c0_0] : memref<88x8xf32, #tpu.memory_space<vmem>>, vector<8x8xf32>
    %c8 = arith.constant 8 : index
    %c0_1 = arith.constant 0 : index
    %1 = vector.load %arg2[%c8, %c0_1] : memref<88x8xf32, #tpu.memory_space<vmem>>, vector<8x8xf32>
    %c16 = arith.constant 16 : index
    %c0_2 = arith.constant 0 : index
    %2 = vector.load %arg2[%c16, %c0_2] : memref<88x8xf32, #tpu.memory_space<vmem>>, vector<8x8xf32>
    %c24 = arith.constant 24 : index
    %c0_3 = arith.constant 0 : index
    %3 = vector.load %arg2[%c24, %c0_3] : memref<88x8xf32, #tpu.memory_space<vmem>>, vector<8x8xf32>
    %c32 = arith.constant 32 : index
    %c0_4 = arith.constant 0 : index
    %4 = vector.load %arg2[%c32, %c0_4] : memref<88x8xf32, #tpu.memory_space<vmem>>, vector<16x8xf32>
    %c48 = arith.constant 48 : index
    %c0_5 = arith.constant 0 : index
    %5 = vector.load %arg2[%c48, %c0_5] : memref<88x8xf32, #tpu.memory_space<vmem>>, vector<16x8xf32>
    %c64 = arith.constant 64 : index
    %c0_6 = arith.constant 0 : index
    %6 = vector.load %arg2[%c64, %c0_6] : memref<88x8xf32, #tpu.memory_space<vmem>>, vector<8x8xf32>
    %7 = vector.extract_strided_slice %6 {offsets = [0, 0], sizes = [8, 1], strides = [1, 1]} : vector<8x8xf32> to vector<8x1xf32>
    %8 = vector.extract_strided_slice %6 {offsets = [0, 1], sizes = [8, 1], strides = [1, 1]} : vector<8x8xf32> to vector<8x1xf32>
    %9 = vector.extract_strided_slice %6 {offsets = [0, 2], sizes = [8, 1], strides = [1, 1]} : vector<8x8xf32> to vector<8x1xf32>
    %10 = vector.extract_strided_slice %6 {offsets = [0, 3], sizes = [8, 1], strides = [1, 1]} : vector<8x8xf32> to vector<8x1xf32>
    %11 = vector.extract_strided_slice %6 {offsets = [0, 4], sizes = [8, 1], strides = [1, 1]} : vector<8x8xf32> to vector<8x1xf32>
    %12 = vector.extract_strided_slice %6 {offsets = [0, 5], sizes = [8, 1], strides = [1, 1]} : vector<8x8xf32> to vector<8x1xf32>
    %c72 = arith.constant 72 : index
    %c0_7 = arith.constant 0 : index
    %13 = vector.load %arg2[%c72, %c0_7] : memref<88x8xf32, #tpu.memory_space<vmem>>, vector<16x8xf32>
    %14 = vector.extract_strided_slice %13 {offsets = [0, 0], sizes = [16, 1], strides = [1, 1]} : vector<16x8xf32> to vector<16x1xf32>
    %15 = vector.extract_strided_slice %13 {offsets = [0, 1], sizes = [16, 1], strides = [1, 1]} : vector<16x8xf32> to vector<16x1xf32>
    %16 = tpu.iota {dimensions = array<i32: 0>} : vector<258x128xi32>
    %17 = tpu.iota {dimensions = array<i32: 1>} : vector<258x128xi32>
    %c2_i32 = arith.constant 2 : i32
    %18 = vector.broadcast %c2_i32 : i32 to vector<258x128xi32>
    %19 = arith.muli %17, %18 : vector<258x128xi32>
    %c0_i32 = arith.constant 0 : i32
    %20 = vector.broadcast %c0_i32 : i32 to vector<258x128xi32>
    %21 = arith.addi %19, %20 : vector<258x128xi32>
    %22 = arith.cmpi eq, %16, %21 : vector<258x128xi32>
    %23 = arith.extui %22 : vector<258x128xi1> to vector<258x128xi32>
    %24 = arith.sitofp %23 : vector<258x128xi32> to vector<258x128xf32>
    %c2_i32_8 = arith.constant 2 : i32
    %25 = vector.broadcast %c2_i32_8 : i32 to vector<258x128xi32>
    %26 = arith.muli %17, %25 : vector<258x128xi32>
    %c1_i32 = arith.constant 1 : i32
    %27 = vector.broadcast %c1_i32 : i32 to vector<258x128xi32>
    %28 = arith.addi %26, %27 : vector<258x128xi32>
    %29 = arith.cmpi eq, %16, %28 : vector<258x128xi32>
    %30 = arith.extui %29 : vector<258x128xi1> to vector<258x128xi32>
    %31 = arith.sitofp %30 : vector<258x128xi32> to vector<258x128xf32>
    %c2_i32_9 = arith.constant 2 : i32
    %32 = vector.broadcast %c2_i32_9 : i32 to vector<258x128xi32>
    %33 = arith.muli %17, %32 : vector<258x128xi32>
    %c2_i32_10 = arith.constant 2 : i32
    %34 = vector.broadcast %c2_i32_10 : i32 to vector<258x128xi32>
    %35 = arith.addi %33, %34 : vector<258x128xi32>
    %36 = arith.cmpi eq, %16, %35 : vector<258x128xi32>
    %37 = arith.extui %36 : vector<258x128xi1> to vector<258x128xi32>
    %38 = arith.sitofp %37 : vector<258x128xi32> to vector<258x128xf32>
    %c2_i32_11 = arith.constant 2 : i32
    %39 = vector.broadcast %c2_i32_11 : i32 to vector<258x128xi32>
    %40 = arith.muli %17, %39 : vector<258x128xi32>
    %c3_i32 = arith.constant 3 : i32
    %41 = vector.broadcast %c3_i32 : i32 to vector<258x128xi32>
    %42 = arith.addi %40, %41 : vector<258x128xi32>
    %43 = arith.cmpi eq, %16, %42 : vector<258x128xi32>
    %44 = arith.extui %43 : vector<258x128xi1> to vector<258x128xi32>
    %45 = arith.sitofp %44 : vector<258x128xi32> to vector<258x128xf32>
    %46 = tpu.iota {dimensions = array<i32: 1>} : vector<1x128xi32>
    %c1_i32_12 = arith.constant 1 : i32
    %47 = vector.broadcast %c1_i32_12 : i32 to vector<1x128xi32>
    %48 = arith.cmpi sge, %46, %47 : vector<1x128xi32>
    %c126_i32 = arith.constant 126 : i32
    %49 = vector.broadcast %c126_i32 : i32 to vector<1x128xi32>
    %50 = arith.cmpi sle, %46, %49 : vector<1x128xi32>
    %c0_13 = arith.constant 0 : index
    %c0_14 = arith.constant 0 : index
    %c0_15 = arith.constant 0 : index
    %51 = vector.load %arg1[%c0_13, %c0_14, %c0_15] : memref<2x8x258xf32, #tpu.memory_space<vmem>>, vector<1x8x258xf32>
    %52 = vector.shape_cast %51 : vector<1x8x258xf32> to vector<8x258xf32>
    %cst = arith.constant dense<0.000000e+00> : vector<8x128xf32>
    %53 = tpu.matmul %52, %24, %cst {dimension_numbers = #tpu.dot_dimension_numbers<[1], [0], [0], [1], [0, 0, 1, 1], [], []>} : vector<8x258xf32>, vector<258x128xf32>, vector<8x128xf32> -> vector<8x128xf32>
    %cst_16 = arith.constant dense<0.000000e+00> : vector<8x128xf32>
    %54 = tpu.matmul %0, %53, %cst_16 {dimension_numbers = #tpu.dot_dimension_numbers<[1], [0], [0], [1], [0, 0, 1, 1], [], []>} : vector<8x8xf32>, vector<8x128xf32>, vector<8x128xf32> -> vector<8x128xf32>
    %cst_17 = arith.constant dense<0.000000e+00> : vector<8x128xf32>
    %55 = tpu.matmul %52, %31, %cst_17 {dimension_numbers = #tpu.dot_dimension_numbers<[1], [0], [0], [1], [0, 0, 1, 1], [], []>} : vector<8x258xf32>, vector<258x128xf32>, vector<8x128xf32> -> vector<8x128xf32>
    %cst_18 = arith.constant dense<0.000000e+00> : vector<8x128xf32>
    %56 = tpu.matmul %1, %55, %cst_18 {dimension_numbers = #tpu.dot_dimension_numbers<[1], [0], [0], [1], [0, 0, 1, 1], [], []>} : vector<8x8xf32>, vector<8x128xf32>, vector<8x128xf32> -> vector<8x128xf32>
    %57 = arith.addf %54, %56 : vector<8x128xf32>
    %cst_19 = arith.constant dense<0.000000e+00> : vector<8x128xf32>
    %58 = tpu.matmul %52, %38, %cst_19 {dimension_numbers = #tpu.dot_dimension_numbers<[1], [0], [0], [1], [0, 0, 1, 1], [], []>} : vector<8x258xf32>, vector<258x128xf32>, vector<8x128xf32> -> vector<8x128xf32>
    %cst_20 = arith.constant dense<0.000000e+00> : vector<8x128xf32>
    %59 = tpu.matmul %2, %58, %cst_20 {dimension_numbers = #tpu.dot_dimension_numbers<[1], [0], [0], [1], [0, 0, 1, 1], [], []>} : vector<8x8xf32>, vector<8x128xf32>, vector<8x128xf32> -> vector<8x128xf32>
    %60 = arith.addf %57, %59 : vector<8x128xf32>
    %cst_21 = arith.constant dense<0.000000e+00> : vector<8x128xf32>
    %61 = tpu.matmul %52, %45, %cst_21 {dimension_numbers = #tpu.dot_dimension_numbers<[1], [0], [0], [1], [0, 0, 1, 1], [], []>} : vector<8x258xf32>, vector<258x128xf32>, vector<8x128xf32> -> vector<8x128xf32>
    %cst_22 = arith.constant dense<0.000000e+00> : vector<8x128xf32>
    %62 = tpu.matmul %3, %61, %cst_22 {dimension_numbers = #tpu.dot_dimension_numbers<[1], [0], [0], [1], [0, 0, 1, 1], [], []>} : vector<8x8xf32>, vector<8x128xf32>, vector<8x128xf32> -> vector<8x128xf32>
    %63 = arith.addf %60, %62 : vector<8x128xf32>
    %64 = vector.broadcast %12 : vector<8x1xf32> to vector<8x128xf32>
    %65 = arith.addf %63, %64 : vector<8x128xf32>
    %cst_23 = arith.constant 0.000000e+00 : f32
    %66 = vector.broadcast %cst_23 : f32 to vector<8x128xf32>
    %67 = arith.maximumf %65, %66 : vector<8x128xf32>
    %cst_24 = arith.constant dense<0.000000e+00> : vector<16x128xf32>
    %68 = tpu.matmul %4, %67, %cst_24 {dimension_numbers = #tpu.dot_dimension_numbers<[1], [0], [0], [1], [0, 0, 1, 1], [], []>} : vector<16x8xf32>, vector<8x128xf32>, vector<16x128xf32> -> vector<16x128xf32>
    %69 = vector.broadcast %14 : vector<16x1xf32> to vector<16x128xf32>
    %70 = arith.addf %68, %69 : vector<16x128xf32>
    %71 = vector.extract_strided_slice %70 {offsets = [0, 0], sizes = [8, 128], strides = [1, 1]} : vector<16x128xf32> to vector<8x128xf32>
    %72 = vector.extract_strided_slice %70 {offsets = [8, 0], sizes = [8, 128], strides = [1, 1]} : vector<16x128xf32> to vector<8x128xf32>
    %73 = arith.negf %72 : vector<8x128xf32>
    %74 = math.exp %73 : vector<8x128xf32>
    %cst_25 = arith.constant 1.000000e+00 : f32
    %75 = vector.broadcast %cst_25 : f32 to vector<8x128xf32>
    %76 = arith.addf %75, %74 : vector<8x128xf32>
    %77 = arith.divf %75, %76 : vector<8x128xf32>
    %78 = arith.mulf %71, %77 : vector<8x128xf32>
    %c1_i32_26 = arith.constant 1 : i32
    %79 = tpu.dynamic_rotate %78 by %c1_i32_26 dim 1 : vector<8x128xf32>, i32 -> vector<8x128xf32>
    %cst_27 = arith.constant 0.000000e+00 : f32
    %80 = vector.shape_cast %48 : vector<1x128xi1> to vector<1x128xi1>
    %81 = vector.broadcast %80 : vector<1x128xi1> to vector<8x128xi1>
    %82 = vector.broadcast %cst_27 : f32 to vector<8x128xf32>
    %83 = arith.select %81, %79, %82 : vector<8x128xi1>, vector<8x128xf32>
    %c127_i32 = arith.constant 127 : i32
    %84 = tpu.dynamic_rotate %78 by %c127_i32 dim 1 : vector<8x128xf32>, i32 -> vector<8x128xf32>
    %cst_28 = arith.constant 0.000000e+00 : f32
    %85 = vector.shape_cast %50 : vector<1x128xi1> to vector<1x128xi1>
    %86 = vector.broadcast %85 : vector<1x128xi1> to vector<8x128xi1>
    %87 = vector.broadcast %cst_28 : f32 to vector<8x128xf32>
    %88 = arith.select %86, %84, %87 : vector<8x128xi1>, vector<8x128xf32>
    %89 = vector.broadcast %7 : vector<8x1xf32> to vector<8x128xf32>
    %90 = arith.mulf %89, %83 : vector<8x128xf32>
    %91 = vector.broadcast %8 : vector<8x1xf32> to vector<8x128xf32>
    %92 = arith.mulf %91, %78 : vector<8x128xf32>
    %93 = arith.addf %90, %92 : vector<8x128xf32>
    %94 = vector.broadcast %9 : vector<8x1xf32> to vector<8x128xf32>
    %95 = arith.mulf %94, %88 : vector<8x128xf32>
    %96 = arith.addf %93, %95 : vector<8x128xf32>
    %97 = vector.broadcast %11 : vector<8x1xf32> to vector<8x128xf32>
    %98 = arith.addf %96, %97 : vector<8x128xf32>
    %cst_29 = arith.constant 0.000000e+00 : f32
    %99 = vector.broadcast %cst_29 : f32 to vector<8x128xf32>
    %100 = arith.maximumf %98, %99 : vector<8x128xf32>
    %cst_30 = arith.constant 0.000000e+00 : f32
    %101 = vector.broadcast %cst_30 : f32 to vector<8x128xf32>
    %102 = arith.minimumf %98, %101 : vector<8x128xf32>
    %103 = vector.broadcast %10 : vector<8x1xf32> to vector<8x128xf32>
    %104 = arith.mulf %103, %102 : vector<8x128xf32>
    %105 = arith.addf %100, %104 : vector<8x128xf32>
    %cst_31 = arith.constant dense<0.000000e+00> : vector<16x128xf32>
    %106 = tpu.matmul %5, %105, %cst_31 {dimension_numbers = #tpu.dot_dimension_numbers<[1], [0], [0], [1], [0, 0, 1, 1], [], []>} : vector<16x8xf32>, vector<8x128xf32>, vector<16x128xf32> -> vector<16x128xf32>
    %107 = vector.broadcast %15 : vector<16x1xf32> to vector<16x128xf32>
    %108 = arith.addf %106, %107 : vector<16x128xf32>
    %109 = vector.extract_strided_slice %108 {offsets = [0, 0], sizes = [8, 128], strides = [1, 1]} : vector<16x128xf32> to vector<8x128xf32>
    %110 = vector.extract_strided_slice %108 {offsets = [8, 0], sizes = [8, 128], strides = [1, 1]} : vector<16x128xf32> to vector<8x128xf32>
    %111 = arith.negf %110 : vector<8x128xf32>
    %112 = math.exp %111 : vector<8x128xf32>
    %cst_32 = arith.constant 1.000000e+00 : f32
    %113 = vector.broadcast %cst_32 : f32 to vector<8x128xf32>
    %114 = arith.addf %113, %112 : vector<8x128xf32>
    %115 = arith.divf %113, %114 : vector<8x128xf32>
    %116 = arith.mulf %109, %115 : vector<8x128xf32>
    %117 = arith.addf %116, %67 : vector<8x128xf32>
    %c0_33 = arith.constant 0 : index
    %c0_34 = arith.constant 0 : index
    %c0_35 = arith.constant 0 : index
    %118 = vector.load %arg3[%c0_33, %c0_34, %c0_35] : memref<2x8x128xf32, #tpu.memory_space<vmem>>, vector<1x8x128xf32>
    %119 = vector.shape_cast %118 : vector<1x8x128xf32> to vector<8x128xf32>
    %120 = vector.shape_cast %117 : vector<8x128xf32> to vector<1x8x128xf32>
    tpu.vector_store %arg3[%c0_33, %c0_34, %c0_35], %120 {strides = array<i32>} : memref<2x8x128xf32, #tpu.memory_space<vmem>>, vector<1x8x128xf32>,
    %c1 = arith.constant 1 : index
    %c0_36 = arith.constant 0 : index
    %c0_37 = arith.constant 0 : index
    %121 = vector.load %arg1[%c1, %c0_36, %c0_37] : memref<2x8x258xf32, #tpu.memory_space<vmem>>, vector<1x8x258xf32>
    %122 = vector.shape_cast %121 : vector<1x8x258xf32> to vector<8x258xf32>
    %cst_38 = arith.constant dense<0.000000e+00> : vector<8x128xf32>
    %123 = tpu.matmul %122, %24, %cst_38 {dimension_numbers = #tpu.dot_dimension_numbers<[1], [0], [0], [1], [0, 0, 1, 1], [], []>} : vector<8x258xf32>, vector<258x128xf32>, vector<8x128xf32> -> vector<8x128xf32>
    %cst_39 = arith.constant dense<0.000000e+00> : vector<8x128xf32>
    %124 = tpu.matmul %0, %123, %cst_39 {dimension_numbers = #tpu.dot_dimension_numbers<[1], [0], [0], [1], [0, 0, 1, 1], [], []>} : vector<8x8xf32>, vector<8x128xf32>, vector<8x128xf32> -> vector<8x128xf32>
    %cst_40 = arith.constant dense<0.000000e+00> : vector<8x128xf32>
    %125 = tpu.matmul %122, %31, %cst_40 {dimension_numbers = #tpu.dot_dimension_numbers<[1], [0], [0], [1], [0, 0, 1, 1], [], []>} : vector<8x258xf32>, vector<258x128xf32>, vector<8x128xf32> -> vector<8x128xf32>
    %cst_41 = arith.constant dense<0.000000e+00> : vector<8x128xf32>
    %126 = tpu.matmul %1, %125, %cst_41 {dimension_numbers = #tpu.dot_dimension_numbers<[1], [0], [0], [1], [0, 0, 1, 1], [], []>} : vector<8x8xf32>, vector<8x128xf32>, vector<8x128xf32> -> vector<8x128xf32>
    %127 = arith.addf %124, %126 : vector<8x128xf32>
    %cst_42 = arith.constant dense<0.000000e+00> : vector<8x128xf32>
    %128 = tpu.matmul %122, %38, %cst_42 {dimension_numbers = #tpu.dot_dimension_numbers<[1], [0], [0], [1], [0, 0, 1, 1], [], []>} : vector<8x258xf32>, vector<258x128xf32>, vector<8x128xf32> -> vector<8x128xf32>
    %cst_43 = arith.constant dense<0.000000e+00> : vector<8x128xf32>
    %129 = tpu.matmul %2, %128, %cst_43 {dimension_numbers = #tpu.dot_dimension_numbers<[1], [0], [0], [1], [0, 0, 1, 1], [], []>} : vector<8x8xf32>, vector<8x128xf32>, vector<8x128xf32> -> vector<8x128xf32>
    %130 = arith.addf %127, %129 : vector<8x128xf32>
    %cst_44 = arith.constant dense<0.000000e+00> : vector<8x128xf32>
    %131 = tpu.matmul %122, %45, %cst_44 {dimension_numbers = #tpu.dot_dimension_numbers<[1], [0], [0], [1], [0, 0, 1, 1], [], []>} : vector<8x258xf32>, vector<258x128xf32>, vector<8x128xf32> -> vector<8x128xf32>
    %cst_45 = arith.constant dense<0.000000e+00> : vector<8x128xf32>
    %132 = tpu.matmul %3, %131, %cst_45 {dimension_numbers = #tpu.dot_dimension_numbers<[1], [0], [0], [1], [0, 0, 1, 1], [], []>} : vector<8x8xf32>, vector<8x128xf32>, vector<8x128xf32> -> vector<8x128xf32>
    %133 = arith.addf %130, %132 : vector<8x128xf32>
    %134 = vector.broadcast %12 : vector<8x1xf32> to vector<8x128xf32>
    %135 = arith.addf %133, %134 : vector<8x128xf32>
    %cst_46 = arith.constant 0.000000e+00 : f32
    %136 = vector.broadcast %cst_46 : f32 to vector<8x128xf32>
    %137 = arith.maximumf %135, %136 : vector<8x128xf32>
    %cst_47 = arith.constant dense<0.000000e+00> : vector<16x128xf32>
    %138 = tpu.matmul %4, %137, %cst_47 {dimension_numbers = #tpu.dot_dimension_numbers<[1], [0], [0], [1], [0, 0, 1, 1], [], []>} : vector<16x8xf32>, vector<8x128xf32>, vector<16x128xf32> -> vector<16x128xf32>
    %139 = vector.broadcast %14 : vector<16x1xf32> to vector<16x128xf32>
    %140 = arith.addf %138, %139 : vector<16x128xf32>
    %141 = vector.extract_strided_slice %140 {offsets = [0, 0], sizes = [8, 128], strides = [1, 1]} : vector<16x128xf32> to vector<8x128xf32>
    %142 = vector.extract_strided_slice %140 {offsets = [8, 0], sizes = [8, 128], strides = [1, 1]} : vector<16x128xf32> to vector<8x128xf32>
    %143 = arith.negf %142 : vector<8x128xf32>
    %144 = math.exp %143 : vector<8x128xf32>
    %cst_48 = arith.constant 1.000000e+00 : f32
    %145 = vector.broadcast %cst_48 : f32 to vector<8x128xf32>
    %146 = arith.addf %145, %144 : vector<8x128xf32>
    %147 = arith.divf %145, %146 : vector<8x128xf32>
    %148 = arith.mulf %141, %147 : vector<8x128xf32>
    %c1_i32_49 = arith.constant 1 : i32
    %149 = tpu.dynamic_rotate %148 by %c1_i32_49 dim 1 : vector<8x128xf32>, i32 -> vector<8x128xf32>
    %cst_50 = arith.constant 0.000000e+00 : f32
    %150 = vector.shape_cast %48 : vector<1x128xi1> to vector<1x128xi1>
    %151 = vector.broadcast %150 : vector<1x128xi1> to vector<8x128xi1>
    %152 = vector.broadcast %cst_50 : f32 to vector<8x128xf32>
    %153 = arith.select %151, %149, %152 : vector<8x128xi1>, vector<8x128xf32>
    %c127_i32_51 = arith.constant 127 : i32
    %154 = tpu.dynamic_rotate %148 by %c127_i32_51 dim 1 : vector<8x128xf32>, i32 -> vector<8x128xf32>
    %cst_52 = arith.constant 0.000000e+00 : f32
    %155 = vector.shape_cast %50 : vector<1x128xi1> to vector<1x128xi1>
    %156 = vector.broadcast %155 : vector<1x128xi1> to vector<8x128xi1>
    %157 = vector.broadcast %cst_52 : f32 to vector<8x128xf32>
    %158 = arith.select %156, %154, %157 : vector<8x128xi1>, vector<8x128xf32>
    %159 = vector.broadcast %7 : vector<8x1xf32> to vector<8x128xf32>
    %160 = arith.mulf %159, %153 : vector<8x128xf32>
    %161 = vector.broadcast %8 : vector<8x1xf32> to vector<8x128xf32>
    %162 = arith.mulf %161, %148 : vector<8x128xf32>
    %163 = arith.addf %160, %162 : vector<8x128xf32>
    %164 = vector.broadcast %9 : vector<8x1xf32> to vector<8x128xf32>
    %165 = arith.mulf %164, %158 : vector<8x128xf32>
    %166 = arith.addf %163, %165 : vector<8x128xf32>
    %167 = vector.broadcast %11 : vector<8x1xf32> to vector<8x128xf32>
    %168 = arith.addf %166, %167 : vector<8x128xf32>
    %cst_53 = arith.constant 0.000000e+00 : f32
    %169 = vector.broadcast %cst_53 : f32 to vector<8x128xf32>
    %170 = arith.maximumf %168, %169 : vector<8x128xf32>
    %cst_54 = arith.constant 0.000000e+00 : f32
    %171 = vector.broadcast %cst_54 : f32 to vector<8x128xf32>
    %172 = arith.minimumf %168, %171 : vector<8x128xf32>
    %173 = vector.broadcast %10 : vector<8x1xf32> to vector<8x128xf32>
    %174 = arith.mulf %173, %172 : vector<8x128xf32>
    %175 = arith.addf %170, %174 : vector<8x128xf32>
    %cst_55 = arith.constant dense<0.000000e+00> : vector<16x128xf32>
    %176 = tpu.matmul %5, %175, %cst_55 {dimension_numbers = #tpu.dot_dimension_numbers<[1], [0], [0], [1], [0, 0, 1, 1], [], []>} : vector<16x8xf32>, vector<8x128xf32>, vector<16x128xf32> -> vector<16x128xf32>
    %177 = vector.broadcast %15 : vector<16x1xf32> to vector<16x128xf32>
    %178 = arith.addf %176, %177 : vector<16x128xf32>
    %179 = vector.extract_strided_slice %178 {offsets = [0, 0], sizes = [8, 128], strides = [1, 1]} : vector<16x128xf32> to vector<8x128xf32>
    %180 = vector.extract_strided_slice %178 {offsets = [8, 0], sizes = [8, 128], strides = [1, 1]} : vector<16x128xf32> to vector<8x128xf32>
    %181 = arith.negf %180 : vector<8x128xf32>
    %182 = math.exp %181 : vector<8x128xf32>
    %cst_56 = arith.constant 1.000000e+00 : f32
    %183 = vector.broadcast %cst_56 : f32 to vector<8x128xf32>
    %184 = arith.addf %183, %182 : vector<8x128xf32>
    %185 = arith.divf %183, %184 : vector<8x128xf32>
    %186 = arith.mulf %179, %185 : vector<8x128xf32>
    %187 = arith.addf %186, %137 : vector<8x128xf32>
    %c1_57 = arith.constant 1 : index
    %c0_58 = arith.constant 0 : index
    %c0_59 = arith.constant 0 : index
    %188 = vector.load %arg3[%c1_57, %c0_58, %c0_59] : memref<2x8x128xf32, #tpu.memory_space<vmem>>, vector<1x8x128xf32>
    %189 = vector.shape_cast %188 : vector<1x8x128xf32> to vector<8x128xf32>
    %190 = vector.shape_cast %187 : vector<8x128xf32> to vector<1x8x128xf32>
    tpu.vector_store %arg3[%c1_57, %c0_58, %c0_59], %190 {strides = array<i32>} : memref<2x8x128xf32, #tpu.memory_space<vmem>>, vector<1x8x128xf32>,
    return
  }
  func.func @transform_0(%arg0: i32) -> (i32, i32, i32) {
    %c0_i32 = arith.constant 0 : i32
    %c0_i32_0 = arith.constant 0 : i32
    %c0_i32_1 = arith.constant 0 : i32
    return %arg0, %c0_i32, %c0_i32_0 : i32, i32, i32
  }
  func.func @transform_1(%arg0: i32) -> (i32, i32) {
    %c0_i32 = arith.constant 0 : i32
    %c0_i32_0 = arith.constant 0 : i32
    %c0_i32_1 = arith.constant 0 : i32
    return %c0_i32, %c0_i32_0 : i32, i32
  }
  func.func @transform_2(%arg0: i32) -> (i32, i32, i32) {
    %c0_i32 = arith.constant 0 : i32
    %c0_i32_0 = arith.constant 0 : i32
    %c0_i32_1 = arith.constant 0 : i32
    return %arg0, %c0_i32, %c0_i32_0 : i32, i32, i32
  }
}

</mosaic_0001>

<llo_original>
// kernel: encoder_forward.1
$region0: #{encoder_forward.1}
  #allocation0 [shape = 'u32[]', space=smem, size = 0x4, offset = 0x4, fixed_abs, tag = 'smem constant byte address 0x4 - core index']
  #allocation1 [shape = 'u32[144,128]{1,0:T(1,128)}', space=vmem, size = 0x12000, scoped, tag = 'internal scratch']
  %s0 = inlined_call_operand.vmem [shape: f32[2,8,258], index: 0, kind: input, shape index: {}]
  %s1 = inlined_call_operand.vmem [shape: f32[88,8], index: 1, kind: input, shape index: {}]
  %s2 = inlined_call_operand.hbm [shape: f32[2,8,128], index: 2, kind: output, shape index: {}]
  %s3 = sld [smem:[#allocation0]]
  $region18: #{encoder_forward.1} parent=0
    _
  %s5 = ssub.s32 1, %s3
  %s6 = scalar_select 0, %s5, %s3
  $region1: #{encoder_forward.1} parent=0
    #allocation2 [shape = 'u8[8192]{0}', space=vmem, size = 0x2000, scoped, tag = 'output window, operand 0, single buffered']
    #allocation3 [shape = 's32[1]{0}', space=sflag, size = 0x4, scoped, tag = 'scoped memory for encoder_forward.1']
    %7 = vsyncpa [#allocation3], 0
    // Predicated region
    $region2: #{encoder_forward.1} parent=1 // pred_check
      _
    $region3: #{encoder_forward.1} parent=1 // pred_check_branch
      %9 = sbr.rel (0) target = $region5
    $region4: #{encoder_forward.1} parent=1 // pred_region
      _
    $region5: #{encoder_forward.1} parent=1 // pred_fallthru
      _
    // Predicated region
    $region6: #{encoder_forward.1} parent=1 // pred_check
      _
    $region7: #{encoder_forward.1} parent=1 // pred_check_branch
      %11 = sbr.rel (0) target = $region9
    $region8: #{encoder_forward.1} parent=1 // pred_region
      _
    $region9: #{encoder_forward.1} parent=1 // pred_fallthru
      _
    %v12 = vld [vmem:[%s1] sm:$0xff]
    %v13 = vld [vmem:[%s1 + $0x8] sm:$0xff]
    %v14 = vld [vmem:[%s1 + $0x10] sm:$0xff]
    %v15 = vld [vmem:[%s1 + $0x18] sm:$0xff]
    %v16 = vld [vmem:[%s1 + $0x20] sm:$0xff]
    %v17 = vld [vmem:[%s1 + $0x28] sm:$0xff]
    %v18 = vld [vmem:[%s1 + $0x30] sm:$0xff]
    %v19 = vld [vmem:[%s1 + $0x38] sm:$0xff]
    %v20 = vld [vmem:[%s1 + $0x40] sm:$0xff]
    %v21 = vld [vmem:[%s1 + $0x48] sm:$0xff]
    %v22 = vld [vmem:[%s1 + $0x50] sm:$0xff]
    %v23 = vlaneseq
    %v24 = vshrl.u32 %v23, 7
    %v25 = vadd.s32 %v24, 8
    %v26 = vadd.s32 %v24, 16
    %v27 = vadd.s32 %v24, 24
    %v28 = vadd.s32 %v24, 32
    %v29 = vadd.s32 %v24, 40
    %v30 = vadd.s32 %v24, 48
    %v31 = vadd.s32 %v24, 56
    %v32 = vadd.s32 %v24, 64
    %v33 = vadd.s32 %v24, 72
    %v34 = vadd.s32 %v24, 80
    %v35 = vadd.s32 %v24, 88
    %v36 = vadd.s32 %v24, 96
    %v37 = vadd.s32 %v24, 104
    %v38 = vadd.s32 %v24, 112
    %v39 = vadd.s32 %v24, 120
    %v40 = vadd.s32 %v24, 128
    %v41 = vadd.s32 %v24, 136
    %v42 = vadd.s32 %v24, 144
    %v43 = vadd.s32 %v24, 152
    %v44 = vadd.s32 %v24, 160
    %v45 = vadd.s32 %v24, 168
    %v46 = vadd.s32 %v24, 176
    %v47 = vadd.s32 %v24, 184
    %v48 = vadd.s32 %v24, 192
    %v49 = vadd.s32 %v24, 200
    %v50 = vadd.s32 %v24, 208
    %v51 = vadd.s32 %v24, 216
    %v52 = vadd.s32 %v24, 224
    %v53 = vadd.s32 %v24, 232
    %v54 = vadd.s32 %v24, 240
    %v55 = vadd.s32 %v24, 248
    %v56 = vadd.s32 %v24, 256
    %v57 = vlaneseq
    %v58 = vand.u32 %v57, 127
    %v59 = vmul.u32 %v58, 2
    %vm60 = vcmp.eq.s32.totalorder %v24, %v59
    %vm61 = vcmp.eq.s32.totalorder %v25, %v59
    %vm62 = vcmp.eq.s32.totalorder %v26, %v59
    %vm63 = vcmp.eq.s32.totalorder %v27, %v59
    %vm64 = vcmp.eq.s32.totalorder %v28, %v59
    %vm65 = vcmp.eq.s32.totalorder %v29, %v59
    %vm66 = vcmp.eq.s32.totalorder %v30, %v59
    %vm67 = vcmp.eq.s32.totalorder %v31, %v59
    %vm68 = vcmp.eq.s32.totalorder %v32, %v59
    %vm69 = vcmp.eq.s32.totalorder %v33, %v59
    %vm70 = vcmp.eq.s32.totalorder %v34, %v59
    %vm71 = vcmp.eq.s32.totalorder %v35, %v59
    %vm72 = vcmp.eq.s32.totalorder %v36, %v59
    %vm73 = vcmp.eq.s32.totalorder %v37, %v59
    %vm74 = vcmp.eq.s32.totalorder %v38, %v59
    %vm75 = vcmp.eq.s32.totalorder %v39, %v59
    %vm76 = vcmp.eq.s32.totalorder %v40, %v59
    %vm77 = vcmp.eq.s32.totalorder %v41, %v59
    %vm78 = vcmp.eq.s32.totalorder %v42, %v59
    %vm79 = vcmp.eq.s32.totalorder %v43, %v59
    %vm80 = vcmp.eq.s32.totalorder %v44, %v59
    %vm81 = vcmp.eq.s32.totalorder %v45, %v59
    %vm82 = vcmp.eq.s32.totalorder %v46, %v59
    %vm83 = vcmp.eq.s32.totalorder %v47, %v59
    %vm84 = vcmp.eq.s32.totalorder %v48, %v59
    %vm85 = vcmp.eq.s32.totalorder %v49, %v59
    %vm86 = vcmp.eq.s32.totalorder %v50, %v59
    %vm87 = vcmp.eq.s32.totalorder %v51, %v59
    %vm88 = vcmp.eq.s32.totalorder %v52, %v59
    %vm89 = vcmp.eq.s32.totalorder %v53, %v59
    %vm90 = vcmp.eq.s32.totalorder %v54, %v59
    %vm91 = vcmp.eq.s32.totalorder %v55, %v59
    %vm92 = vcmp.eq.s32.totalorder %v56, %v59
    %v93 = vsel %vm60, 1, 0
    %v94 = vsel %vm61, 1, 0
    %v95 = vsel %vm62, 1, 0
    %v96 = vsel %vm63, 1, 0
    %v97 = vsel %vm64, 1, 0
    %v98 = vsel %vm65, 1, 0
    %v99 = vsel %vm66, 1, 0
    %v100 = vsel %vm67, 1, 0
    %v101 = vsel %vm68, 1, 0
    %v102 = vsel %vm69, 1, 0
    %v103 = vsel %vm70, 1, 0
    %v104 = vsel %vm71, 1, 0
    %v105 = vsel %vm72, 1, 0
    %v106 = vsel %vm73, 1, 0
    %v107 = vsel %vm74, 1, 0
    %v108 = vsel %vm75, 1, 0
    %v109 = vsel %vm76, 1, 0
    %v110 = vsel %vm77, 1, 0
    %v111 = vsel %vm78, 1, 0
    %v112 = vsel %vm79, 1, 0
    %v113 = vsel %vm80, 1, 0
    %v114 = vsel %vm81, 1, 0
    %v115 = vsel %vm82, 1, 0
    %v116 = vsel %vm83, 1, 0
    %v117 = vsel %vm84, 1, 0
    %v118 = vsel %vm85, 1, 0
    %v119 = vsel %vm86, 1, 0
    %v120 = vsel %vm87, 1, 0
    %v121 = vsel %vm88, 1, 0
    %v122 = vsel %vm89, 1, 0
    %v123 = vsel %vm90, 1, 0
    %v124 = vsel %vm91, 1, 0
    %v125 = vsel %vm92, 1, 0
    %v126 = vcvt.s32.f32 %v93
    %v127 = vcvt.s32.f32 %v94
    %v128 = vcvt.s32.f32 %v95
    %v129 = vcvt.s32.f32 %v96
    %v130 = vcvt.s32.f32 %v97
    %v131 = vcvt.s32.f32 %v98
    %v132 = vcvt.s32.f32 %v99
    %v133 = vcvt.s32.f32 %v100
    %v134 = vcvt.s32.f32 %v101
    %v135 = vcvt.s32.f32 %v102
    %v136 = vcvt.s32.f32 %v103
    %v137 = vcvt.s32.f32 %v104
    %v138 = vcvt.s32.f32 %v105
    %v139 = vcvt.s32.f32 %v106
    %v140 = vcvt.s32.f32 %v107
    %v141 = vcvt.s32.f32 %v108
    %v142 = vcvt.s32.f32 %v109
    %v143 = vcvt.s32.f32 %v110
    %v144 = vcvt.s32.f32 %v111
    %v145 = vcvt.s32.f32 %v112
    %v146 = vcvt.s32.f32 %v113
    %v147 = vcvt.s32.f32 %v114
    %v148 = vcvt.s32.f32 %v115
    %v149 = vcvt.s32.f32 %v116
    %v150 = vcvt.s32.f32 %v117
    %v151 = vcvt.s32.f32 %v118
    %v152 = vcvt.s32.f32 %v119
    %v153 = vcvt.s32.f32 %v120
    %v154 = vcvt.s32.f32 %v121
    %v155 = vcvt.s32.f32 %v122
    %v156 = vcvt.s32.f32 %v123
    %v157 = vcvt.s32.f32 %v124
    %v158 = vcvt.s32.f32 %v125
    %v159 = vadd.s32 %v59, 1
    %vm160 = vcmp.eq.s32.totalorder %v24, %v159
    %vm161 = vcmp.eq.s32.totalorder %v25, %v159
    %vm162 = vcmp.eq.s32.totalorder %v26, %v159
    %vm163 = vcmp.eq.s32.totalorder %v27, %v159
    %vm164 = vcmp.eq.s32.totalorder %v28, %v159
    %vm165 = vcmp.eq.s32.totalorder %v29, %v159
    %vm166 = vcmp.eq.s32.totalorder %v30, %v159
    %vm167 = vcmp.eq.s32.totalorder %v31, %v159
    %vm168 = vcmp.eq.s32.totalorder %v32, %v159
    %vm169 = vcmp.eq.s32.totalorder %v33, %v159
    %vm170 = vcmp.eq.s32.totalorder %v34, %v159
    %vm171 = vcmp.eq.s32.totalorder %v35, %v159
    %vm172 = vcmp.eq.s32.totalorder %v36, %v159
    %vm173 = vcmp.eq.s32.totalorder %v37, %v159
    %vm174 = vcmp.eq.s32.totalorder %v38, %v159
    %vm175 = vcmp.eq.s32.totalorder %v39, %v159
    %vm176 = vcmp.eq.s32.totalorder %v40, %v159
    %vm177 = vcmp.eq.s32.totalorder %v41, %v159
    %vm178 = vcmp.eq.s32.totalorder %v42, %v159
    %vm179 = vcmp.eq.s32.totalorder %v43, %v159
    %vm180 = vcmp.eq.s32.totalorder %v44, %v159
    %vm181 = vcmp.eq.s32.totalorder %v45, %v159
    %vm182 = vcmp.eq.s32.totalorder %v46, %v159
    %vm183 = vcmp.eq.s32.totalorder %v47, %v159
    %vm184 = vcmp.eq.s32.totalorder %v48, %v159
    %vm185 = vcmp.eq.s32.totalorder %v49, %v159
    %vm186 = vcmp.eq.s32.totalorder %v50, %v159
    %vm187 = vcmp.eq.s32.totalorder %v51, %v159
    %vm188 = vcmp.eq.s32.totalorder %v52, %v159
    %vm189 = vcmp.eq.s32.totalorder %v53, %v159
    %vm190 = vcmp.eq.s32.totalorder %v54, %v159
    %vm191 = vcmp.eq.s32.totalorder %v55, %v159
    %vm192 = vcmp.eq.s32.totalorder %v56, %v159
    %v193 = vsel %vm160, 1, 0
    %v194 = vsel %vm161, 1, 0
    %v195 = vsel %vm162, 1, 0
    %v196 = vsel %vm163, 1, 0
    %v197 = vsel %vm164, 1, 0
    %v198 = vsel %vm165, 1, 0
    %v199 = vsel %vm166, 1, 0
    %v200 = vsel %vm167, 1, 0
    %v201 = vsel %vm168, 1, 0
    %v202 = vsel %vm169, 1, 0
    %v203 = vsel %vm170, 1, 0
    %v204 = vsel %vm171, 1, 0
    %v205 = vsel %vm172, 1, 0
    %v206 = vsel %vm173, 1, 0
    %v207 = vsel %vm174, 1, 0
    %v208 = vsel %vm175, 1, 0
    %v209 = vsel %vm176, 1, 0
    %v210 = vsel %vm177, 1, 0
    %v211 = vsel %vm178, 1, 0
    %v212 = vsel %vm179, 1, 0
    %v213 = vsel %vm180, 1, 0
    %v214 = vsel %vm181, 1, 0
    %v215 = vsel %vm182, 1, 0
    %v216 = vsel %vm183, 1, 0
    %v217 = vsel %vm184, 1, 0
    %v218 = vsel %vm185, 1, 0
    %v219 = vsel %vm186, 1, 0
    %v220 = vsel %vm187, 1, 0
    %v221 = vsel %vm188, 1, 0
    %v222 = vsel %vm189, 1, 0
    %v223 = vsel %vm190, 1, 0
    %v224 = vsel %vm191, 1, 0
    %v225 = vsel %vm192, 1, 0
    %v226 = vcvt.s32.f32 %v193
    %v227 = vcvt.s32.f32 %v194
    %v228 = vcvt.s32.f32 %v195
    %v229 = vcvt.s32.f32 %v196
    %v230 = vcvt.s32.f32 %v197
    %v231 = vcvt.s32.f32 %v198
    %v232 = vcvt.s32.f32 %v199
    %v233 = vcvt.s32.f32 %v200
    %v234 = vcvt.s32.f32 %v201
    %v235 = vcvt.s32.f32 %v202
    %v236 = vcvt.s32.f32 %v203
    %v237 = vcvt.s32.f32 %v204
    %v238 = vcvt.s32.f32 %v205
    %v239 = vcvt.s32.f32 %v206
    %v240 = vcvt.s32.f32 %v207
    %v241 = vcvt.s32.f32 %v208
    %v242 = vcvt.s32.f32 %v209
    %v243 = vcvt.s32.f32 %v210
    %v244 = vcvt.s32.f32 %v211
    %v245 = vcvt.s32.f32 %v212
    %v246 = vcvt.s32.f32 %v213
    %v247 = vcvt.s32.f32 %v214
    %v248 = vcvt.s32.f32 %v215
    %v249 = vcvt.s32.f32 %v216
    %v250 = vcvt.s32.f32 %v217
    %v251 = vcvt.s32.f32 %v218
    %v252 = vcvt.s32.f32 %v219
    %v253 = vcvt.s32.f32 %v220
    %v254 = vcvt.s32.f32 %v221
    %v255 = vcvt.s32.f32 %v222
    %v256 = vcvt.s32.f32 %v223
    %v257 = vcvt.s32.f32 %v224
    %v258 = vcvt.s32.f32 %v225
    %v259 = vadd.s32 %v59, 2
    %vm260 = vcmp.eq.s32.totalorder %v24, %v259
    %vm261 = vcmp.eq.s32.totalorder %v25, %v259
    %vm262 = vcmp.eq.s32.totalorder %v26, %v259
    %vm263 = vcmp.eq.s32.totalorder %v27, %v259
    %vm264 = vcmp.eq.s32.totalorder %v28, %v259
    %vm265 = vcmp.eq.s32.totalorder %v29, %v259
    %vm266 = vcmp.eq.s32.totalorder %v30, %v259
    %vm267 = vcmp.eq.s32.totalorder %v31, %v259
    %vm268 = vcmp.eq.s32.totalorder %v32, %v259
    %vm269 = vcmp.eq.s32.totalorder %v33, %v259
    %vm270 = vcmp.eq.s32.totalorder %v34, %v259
    %vm271 = vcmp.eq.s32.totalorder %v35, %v259
    %vm272 = vcmp.eq.s32.totalorder %v36, %v259
    %vm273 = vcmp.eq.s32.totalorder %v37, %v259
    %vm274 = vcmp.eq.s32.totalorder %v38, %v259
    %vm275 = vcmp.eq.s32.totalorder %v39, %v259
    %vm276 = vcmp.eq.s32.totalorder %v40, %v259
    %vm277 = vcmp.eq.s32.totalorder %v41, %v259
    %vm278 = vcmp.eq.s32.totalorder %v42, %v259
    %vm279 = vcmp.eq.s32.totalorder %v43, %v259
    %vm280 = vcmp.eq.s32.totalorder %v44, %v259
    %vm281 = vcmp.eq.s32.totalorder %v45, %v259
    %vm282 = vcmp.eq.s32.totalorder %v46, %v259
    %vm283 = vcmp.eq.s32.totalorder %v47, %v259
    %vm284 = vcmp.eq.s32.totalorder %v48, %v259
    %vm285 = vcmp.eq.s32.totalorder %v49, %v259
    %vm286 = vcmp.eq.s32.totalorder %v50, %v259
    %vm287 = vcmp.eq.s32.totalorder %v51, %v259
    %vm288 = vcmp.eq.s32.totalorder %v52, %v259
    %vm289 = vcmp.eq.s32.totalorder %v53, %v259
    %vm290 = vcmp.eq.s32.totalorder %v54, %v259
    %vm291 = vcmp.eq.s32.totalorder %v55, %v259
    %vm292 = vcmp.eq.s32.totalorder %v56, %v259
    %v293 = vsel %vm260, 1, 0
    %v294 = vsel %vm261, 1, 0
    %v295 = vsel %vm262, 1, 0
    %v296 = vsel %vm263, 1, 0
    %v297 = vsel %vm264, 1, 0
    %v298 = vsel %vm265, 1, 0
    %v299 = vsel %vm266, 1, 0
    %v300 = vsel %vm267, 1, 0
    %v301 = vsel %vm268, 1, 0
    %v302 = vsel %vm269, 1, 0
    %v303 = vsel %vm270, 1, 0
    %v304 = vsel %vm271, 1, 0
    %v305 = vsel %vm272, 1, 0
    %v306 = vsel %vm273, 1, 0
    %v307 = vsel %vm274, 1, 0
    %v308 = vsel %vm275, 1, 0
    %v309 = vsel %vm276, 1, 0
    %v310 = vsel %vm277, 1, 0
    %v311 = vsel %vm278, 1, 0
    %v312 = vsel %vm279, 1, 0
    %v313 = vsel %vm280, 1, 0
    %v314 = vsel %vm281, 1, 0
    %v315 = vsel %vm282, 1, 0
    %v316 = vsel %vm283, 1, 0
    %v317 = vsel %vm284, 1, 0
    %v318 = vsel %vm285, 1, 0
    %v319 = vsel %vm286, 1, 0
    %v320 = vsel %vm287, 1, 0
    %v321 = vsel %vm288, 1, 0
    %v322 = vsel %vm289, 1, 0
    %v323 = vsel %vm290, 1, 0
    %v324 = vsel %vm291, 1, 0
    %v325 = vsel %vm292, 1, 0
    %v326 = vcvt.s32.f32 %v293
    %v327 = vcvt.s32.f32 %v294
    %v328 = vcvt.s32.f32 %v295
    %v329 = vcvt.s32.f32 %v296
    %v330 = vcvt.s32.f32 %v297
    %v331 = vcvt.s32.f32 %v298
    %v332 = vcvt.s32.f32 %v299
    %v333 = vcvt.s32.f32 %v300
    %v334 = vcvt.s32.f32 %v301
    %v335 = vcvt.s32.f32 %v302
    %v336 = vcvt.s32.f32 %v303
    %v337 = vcvt.s32.f32 %v304
    %v338 = vcvt.s32.f32 %v305
    %v339 = vcvt.s32.f32 %v306
    %v340 = vcvt.s32.f32 %v307
    %v341 = vcvt.s32.f32 %v308
    %v342 = vcvt.s32.f32 %v309
    %v343 = vcvt.s32.f32 %v310
    %v344 = vcvt.s32.f32 %v311
    %v345 = vcvt.s32.f32 %v312
    %v346 = vcvt.s32.f32 %v313
    %v347 = vcvt.s32.f32 %v314
    %v348 = vcvt.s32.f32 %v315
    %v349 = vcvt.s32.f32 %v316
    %v350 = vcvt.s32.f32 %v317
    %v351 = vcvt.s32.f32 %v318
    %v352 = vcvt.s32.f32 %v319
    %v353 = vcvt.s32.f32 %v320
    %v354 = vcvt.s32.f32 %v321
    %v355 = vcvt.s32.f32 %v322
    %v356 = vcvt.s32.f32 %v323
    %v357 = vcvt.s32.f32 %v324
    %v358 = vcvt.s32.f32 %v325
    %v359 = vadd.s32 %v59, 3
    %vm360 = vcmp.eq.s32.totalorder %v24, %v359
    %vm361 = vcmp.eq.s32.totalorder %v25, %v359
    %vm362 = vcmp.eq.s32.totalorder %v26, %v359
    %vm363 = vcmp.eq.s32.totalorder %v27, %v359
    %vm364 = vcmp.eq.s32.totalorder %v28, %v359
    %vm365 = vcmp.eq.s32.totalorder %v29, %v359
    %vm366 = vcmp.eq.s32.totalorder %v30, %v359
    %vm367 = vcmp.eq.s32.totalorder %v31, %v359
    %vm368 = vcmp.eq.s32.totalorder %v32, %v359
    %vm369 = vcmp.eq.s32.totalorder %v33, %v359
    %vm370 = vcmp.eq.s32.totalorder %v34, %v359
    %vm371 = vcmp.eq.s32.totalorder %v35, %v359
    %vm372 = vcmp.eq.s32.totalorder %v36, %v359
    %vm373 = vcmp.eq.s32.totalorder %v37, %v359
    %vm374 = vcmp.eq.s32.totalorder %v38, %v359
    %vm375 = vcmp.eq.s32.totalorder %v39, %v359
    %vm376 = vcmp.eq.s32.totalorder %v40, %v359
    %vm377 = vcmp.eq.s32.totalorder %v41, %v359
    %vm378 = vcmp.eq.s32.totalorder %v42, %v359
    %vm379 = vcmp.eq.s32.totalorder %v43, %v359
    %vm380 = vcmp.eq.s32.totalorder %v44, %v359
    %vm381 = vcmp.eq.s32.totalorder %v45, %v359
    %vm382 = vcmp.eq.s32.totalorder %v46, %v359
    %vm383 = vcmp.eq.s32.totalorder %v47, %v359
    %vm384 = vcmp.eq.s32.totalorder %v48, %v359
    %vm385 = vcmp.eq.s32.totalorder %v49, %v359
    %vm386 = vcmp.eq.s32.totalorder %v50, %v359
    %vm387 = vcmp.eq.s32.totalorder %v51, %v359
    %vm388 = vcmp.eq.s32.totalorder %v52, %v359
    %vm389 = vcmp.eq.s32.totalorder %v53, %v359
    %vm390 = vcmp.eq.s32.totalorder %v54, %v359
    %vm391 = vcmp.eq.s32.totalorder %v55, %v359
    %vm392 = vcmp.eq.s32.totalorder %v56, %v359
    %v393 = vsel %vm360, 1, 0
    %v394 = vsel %vm361, 1, 0
    %v395 = vsel %vm362, 1, 0
    %v396 = vsel %vm363, 1, 0
    %v397 = vsel %vm364, 1, 0
    %v398 = vsel %vm365, 1, 0
    %v399 = vsel %vm366, 1, 0
    %v400 = vsel %vm367, 1, 0
    %v401 = vsel %vm368, 1, 0
    %v402 = vsel %vm369, 1, 0
    %v403 = vsel %vm370, 1, 0
    %v404 = vsel %vm371, 1, 0
    %v405 = vsel %vm372, 1, 0
    %v406 = vsel %vm373, 1, 0
    %v407 = vsel %vm374, 1, 0
    %v408 = vsel %vm375, 1, 0
    %v409 = vsel %vm376, 1, 0
    %v410 = vsel %vm377, 1, 0
    %v411 = vsel %vm378, 1, 0
    %v412 = vsel %vm379, 1, 0
    %v413 = vsel %vm380, 1, 0
    %v414 = vsel %vm381, 1, 0
    %v415 = vsel %vm382, 1, 0
    %v416 = vsel %vm383, 1, 0
    %v417 = vsel %vm384, 1, 0
    %v418 = vsel %vm385, 1, 0
    %v419 = vsel %vm386, 1, 0
    %v420 = vsel %vm387, 1, 0
    %v421 = vsel %vm388, 1, 0
    %v422 = vsel %vm389, 1, 0
    %v423 = vsel %vm390, 1, 0
    %v424 = vsel %vm391, 1, 0
    %v425 = vsel %vm392, 1, 0
    %v426 = vcvt.s32.f32 %v393
    %v427 = vcvt.s32.f32 %v394
    %v428 = vcvt.s32.f32 %v395
    %v429 = vcvt.s32.f32 %v396
    %v430 = vcvt.s32.f32 %v397
    %v431 = vcvt.s32.f32 %v398
    %v432 = vcvt.s32.f32 %v399
    %v433 = vcvt.s32.f32 %v400
    %v434 = vcvt.s32.f32 %v401
    %v435 = vcvt.s32.f32 %v402
    %v436 = vcvt.s32.f32 %v403
    %v437 = vcvt.s32.f32 %v404
    %v438 = vcvt.s32.f32 %v405
    %v439 = vcvt.s32.f32 %v406
    %v440 = vcvt.s32.f32 %v407
    %v441 = vcvt.s32.f32 %v408
    %v442 = vcvt.s32.f32 %v409
    %v443 = vcvt.s32.f32 %v410
    %v444 = vcvt.s32.f32 %v411
    %v445 = vcvt.s32.f32 %v412
    %v446 = vcvt.s32.f32 %v413
    %v447 = vcvt.s32.f32 %v414
    %v448 = vcvt.s32.f32 %v415
    %v449 = vcvt.s32.f32 %v416
    %v450 = vcvt.s32.f32 %v417
    %v451 = vcvt.s32.f32 %v418
    %v452 = vcvt.s32.f32 %v419
    %v453 = vcvt.s32.f32 %v420
    %v454 = vcvt.s32.f32 %v421
    %v455 = vcvt.s32.f32 %v422
    %v456 = vcvt.s32.f32 %v423
    %v457 = vcvt.s32.f32 %v424
    %v458 = vcvt.s32.f32 %v425
    %vm459 = vcmp.ge.s32.totalorder %v58, 1
    %vm460 = vcmp.le.s32.totalorder %v58, 126
    %v461 = vld [vmem:[%s0] sm:$0xff]
    %v462 = vld [vmem:[%s0 + $0x8] sm:$0xff]
    %v463 = vld [vmem:[%s0 + $0x10] sm:$0xff]
    %vm464 = vcmask 15360
    %v466 = vsel %vm464, %v463, 0
    %vm468 = vcmask 1041408
    %v470 = vsel %vm468, %v158, 0
    %472 = vmatprep.subr.mxu0 0.0
    %473 = vmatpush1.msra.mxu0 %v141
    %474 = vmatprep.subr.mxu0 0.0
    %475 = vmatpush1.msra.mxu0 %v140
    %476 = vmatprep.subr.mxu0 0.0
    %477 = vmatpush1.msra.mxu0 %v139
    %478 = vmatprep.subr.mxu0 0.0
    %479 = vmatpush1.msra.mxu0 %v138
    %480 = vmatprep.subr.mxu0 0.0
    %481 = vmatpush1.msra.mxu0 %v137
    %482 = vmatprep.subr.mxu0 0.0
    %483 = vmatpush1.msra.mxu0 %v136
    %484 = vmatprep.subr.mxu0 0.0
    %485 = vmatpush1.msra.mxu0 %v135
    %486 = vmatprep.subr.mxu0 0.0
    %487 = vmatpush1.msra.mxu0 %v134
    %488 = vmatprep.subr.mxu0 0.0
    %489 = vmatpush1.msra.mxu0 %v133
    %490 = vmatprep.subr.mxu0 0.0
    %491 = vmatpush1.msra.mxu0 %v132
    %492 = vmatprep.subr.mxu0 0.0
    %493 = vmatpush1.msra.mxu0 %v131
    %494 = vmatprep.subr.mxu0 0.0
    %495 = vmatpush1.msra.mxu0 %v130
    %496 = vmatprep.subr.mxu0 0.0
    %497 = vmatpush1.msra.mxu0 %v129
    %498 = vmatprep.subr.mxu0 0.0
    %499 = vmatpush1.msra.mxu0 %v128
    %500 = vmatprep.subr.mxu0 0.0
    %501 = vmatpush1.msra.mxu0 %v127
    %502 = vmatprep.subr.mxu0 0.0
    %503 = vmatpush1.msra.mxu0 %v126
    %504 = vmatprep.subr.mxu0 0.0
    %505 = vmatpush2.msra.mxu0 %v157
    %506 = vmatprep.subr.mxu0 0.0
    %507 = vmatpush2.msra.mxu0 %v156
    %508 = vmatprep.subr.mxu0 0.0
    %509 = vmatpush2.msra.mxu0 %v155
    %510 = vmatprep.subr.mxu0 0.0
    %511 = vmatpush2.msra.mxu0 %v154
    %512 = vmatprep.subr.mxu0 0.0
    %513 = vmatpush2.msra.mxu0 %v153
    %514 = vmatprep.subr.mxu0 0.0
    %515 = vmatpush2.msra.mxu0 %v152
    %516 = vmatprep.subr.mxu0 0.0
    %517 = vmatpush2.msra.mxu0 %v151
    %518 = vmatprep.subr.mxu0 0.0
    %519 = vmatpush2.msra.mxu0 %v150
    %520 = vmatprep.subr.mxu0 0.0
    %521 = vmatpush2.msra.mxu0 %v149
    %522 = vmatprep.subr.mxu0 0.0
    %523 = vmatpush2.msra.mxu0 %v148
    %524 = vmatprep.subr.mxu0 0.0
    %525 = vmatpush2.msra.mxu0 %v147
    %526 = vmatprep.subr.mxu0 0.0
    %527 = vmatpush2.msra.mxu0 %v146
    %528 = vmatprep.subr.mxu0 0.0
    %529 = vmatpush2.msra.mxu0 %v145
    %530 = vmatprep.subr.mxu0 0.0
    %531 = vmatpush2.msra.mxu0 %v144
    %532 = vmatprep.subr.mxu0 0.0
    %533 = vmatpush2.msra.mxu0 %v143
    %534 = vmatprep.subr.mxu0 0.0
    %535 = vmatpush2.msra.mxu0 %v142
    %536 = vmatprep.mubr.f32.mxu0 %v462
    %537 = vmatmul.mubr.f32.gmra.mxu0 %v461
    %v538 = vpop.f32.mrf.mxu0
    %v539 = vadd.f32 0.0, %v538
    %v540 = vpop.f32.mrf.mxu0
    %541 = vdwg.mxu0
    %542 = vmatprep.subr.mxu0 0.0
    %543 = vmatpush1.msra.mxu0 0.0
    %544 = vmatprep.subr.mxu0 0.0
    %545 = vmatpush1.msra.mxu0 0.0
    %546 = vmatprep.subr.mxu0 0.0
    %547 = vmatpush1.msra.mxu0 0.0
    %548 = vmatprep.subr.mxu0 0.0
    %549 = vmatpush1.msra.mxu0 0.0
    %550 = vmatprep.subr.mxu0 0.0
    %551 = vmatpush1.msra.mxu0 0.0
    %552 = vmatprep.subr.mxu0 0.0
    %553 = vmatpush1.msra.mxu0 0.0
    %554 = vmatprep.subr.mxu0 0.0
    %555 = vmatpush1.msra.mxu0 0.0
    %556 = vmatprep.subr.mxu0 0.0
    %557 = vmatpush1.msra.mxu0 0.0
    %558 = vmatprep.subr.mxu0 0.0
    %559 = vmatpush1.msra.mxu0 0.0
    %560 = vmatprep.subr.mxu0 0.0
    %561 = vmatpush1.msra.mxu0 0.0
    %562 = vmatprep.subr.mxu0 0.0
    %563 = vmatpush1.msra.mxu0 0.0
    %564 = vmatprep.subr.mxu0 0.0
    %565 = vmatpush1.msra.mxu0 0.0
    %566 = vmatprep.subr.mxu0 0.0
    %567 = vmatpush1.msra.mxu0 0.0
    %568 = vmatprep.subr.mxu0 0.0
    %569 = vmatpush1.msra.mxu0 0.0
    %570 = vmatprep.subr.mxu0 0.0
    %571 = vmatpush1.msra.mxu0 0.0
    %572 = vmatprep.subr.mxu0 0.0
    %573 = vmatpush1.msra.mxu0 %v470
    %574 = vmatprep.subr.mxu0 0.0
    %575 = vmatpush2.msra.mxu0 0.0
    %576 = vmatprep.subr.mxu0 0.0
    %577 = vmatpush2.msra.mxu0 0.0
    %578 = vmatprep.subr.mxu0 0.0
    %579 = vmatpush2.msra.mxu0 0.0
    %580 = vmatprep.subr.mxu0 0.0
    %581 = vmatpush2.msra.mxu0 0.0
    %582 = vmatprep.subr.mxu0 0.0
    %583 = vmatpush2.msra.mxu0 0.0
    %584 = vmatprep.subr.mxu0 0.0
    %585 = vmatpush2.msra.mxu0 0.0
    %586 = vmatprep.subr.mxu0 0.0
    %587 = vmatpush2.msra.mxu0 0.0
    %588 = vmatprep.subr.mxu0 0.0
    %589 = vmatpush2.msra.mxu0 0.0
    %590 = vmatprep.subr.mxu0 0.0
    %591 = vmatpush2.msra.mxu0 0.0
    %592 = vmatprep.subr.mxu0 0.0
    %593 = vmatpush2.msra.mxu0 0.0
    %594 = vmatprep.subr.mxu0 0.0
    %595 = vmatpush2.msra.mxu0 0.0
    %596 = vmatprep.subr.mxu0 0.0
    %597 = vmatpush2.msra.mxu0 0.0
    %598 = vmatprep.subr.mxu0 0.0
    %599 = vmatpush2.msra.mxu0 0.0
    %600 = vmatprep.subr.mxu0 0.0
    %601 = vmatpush2.msra.mxu0 0.0
    %602 = vmatprep.subr.mxu0 0.0
    %603 = vmatpush2.msra.mxu0 0.0
    %604 = vmatprep.subr.mxu0 0.0
    %605 = vmatpush2.msra.mxu0 0.0
    %606 = vmatprep.mubr.f32.mxu0 0.0
    %607 = vmatmul.mubr.f32.gmra.mxu0 %v466
    %v608 = vpop.f32.mrf.mxu0
    %v609 = vadd.f32 %v539, %v608
    %v610 = vpop.f32.mrf.mxu0
    %611 = vdwg.mxu0
    %v613 = vsel %vm468, %v258, 0
    %615 = vmatprep.subr.mxu0 0.0
    %616 = vmatpush1.msra.mxu0 %v241
    %617 = vmatprep.subr.mxu0 0.0
    %618 = vmatpush1.msra.mxu0 %v240
    %619 = vmatprep.subr.mxu0 0.0
    %620 = vmatpush1.msra.mxu0 %v239
    %621 = vmatprep.subr.mxu0 0.0
    %622 = vmatpush1.msra.mxu0 %v238
    %623 = vmatprep.subr.mxu0 0.0
    %624 = vmatpush1.msra.mxu0 %v237
    %625 = vmatprep.subr.mxu0 0.0
    %626 = vmatpush1.msra.mxu0 %v236
    %627 = vmatprep.subr.mxu0 0.0
    %628 = vmatpush1.msra.mxu0 %v235
    %629 = vmatprep.subr.mxu0 0.0
    %630 = vmatpush1.msra.mxu0 %v234
    %631 = vmatprep.subr.mxu0 0.0
    %632 = vmatpush1.msra.mxu0 %v233
    %633 = vmatprep.subr.mxu0 0.0
    %634 = vmatpush1.msra.mxu0 %v232
    %635 = vmatprep.subr.mxu0 0.0
    %636 = vmatpush1.msra.mxu0 %v231
    %637 = vmatprep.subr.mxu0 0.0
    %638 = vmatpush1.msra.mxu0 %v230
    %639 = vmatprep.subr.mxu0 0.0
    %640 = vmatpush1.msra.mxu0 %v229
    %641 = vmatprep.subr.mxu0 0.0
    %642 = vmatpush1.msra.mxu0 %v228
    %643 = vmatprep.subr.mxu0 0.0
    %644 = vmatpush1.msra.mxu0 %v227
    %645 = vmatprep.subr.mxu0 0.0
    %646 = vmatpush1.msra.mxu0 %v226
    %647 = vmatprep.subr.mxu0 0.0
    %648 = vmatpush2.msra.mxu0 %v257
    %649 = vmatprep.subr.mxu0 0.0
    %650 = vmatpush2.msra.mxu0 %v256
    %651 = vmatprep.subr.mxu0 0.0
    %652 = vmatpush2.msra.mxu0 %v255
    %653 = vmatprep.subr.mxu0 0.0
    %654 = vmatpush2.msra.mxu0 %v254
    %655 = vmatprep.subr.mxu0 0.0
    %656 = vmatpush2.msra.mxu0 %v253
    %657 = vmatprep.subr.mxu0 0.0
    %658 = vmatpush2.msra.mxu0 %v252
    %659 = vmatprep.subr.mxu0 0.0
    %660 = vmatpush2.msra.mxu0 %v251
    %661 = vmatprep.subr.mxu0 0.0
    %662 = vmatpush2.msra.mxu0 %v250
    %663 = vmatprep.subr.mxu0 0.0
    %664 = vmatpush2.msra.mxu0 %v249
    %665 = vmatprep.subr.mxu0 0.0
    %666 = vmatpush2.msra.mxu0 %v248
    %667 = vmatprep.subr.mxu0 0.0
    %668 = vmatpush2.msra.mxu0 %v247
    %669 = vmatprep.subr.mxu0 0.0
    %670 = vmatpush2.msra.mxu0 %v246
    %671 = vmatprep.subr.mxu0 0.0
    %672 = vmatpush2.msra.mxu0 %v245
    %673 = vmatprep.subr.mxu0 0.0
    %674 = vmatpush2.msra.mxu0 %v244
    %675 = vmatprep.subr.mxu0 0.0
    %676 = vmatpush2.msra.mxu0 %v243
    %677 = vmatprep.subr.mxu0 0.0
    %678 = vmatpush2.msra.mxu0 %v242
    %679 = vmatprep.mubr.f32.mxu0 %v462
    %680 = vmatmul.mubr.f32.gmra.mxu0 %v461
    %v681 = vpop.f32.mrf.mxu0
    %v682 = vadd.f32 0.0, %v681
    %v683 = vpop.f32.mrf.mxu0
    %684 = vdwg.mxu0
    %685 = vmatprep.subr.mxu0 0.0
    %686 = vmatpush1.msra.mxu0 0.0
    %687 = vmatprep.subr.mxu0 0.0
    %688 = vmatpush1.msra.mxu0 0.0
    %689 = vmatprep.subr.mxu0 0.0
    %690 = vmatpush1.msra.mxu0 0.0
    %691 = vmatprep.subr.mxu0 0.0
    %692 = vmatpush1.msra.mxu0 0.0
    %693 = vmatprep.subr.mxu0 0.0
    %694 = vmatpush1.msra.mxu0 0.0
    %695 = vmatprep.subr.mxu0 0.0
    %696 = vmatpush1.msra.mxu0 0.0
    %697 = vmatprep.subr.mxu0 0.0
    %698 = vmatpush1.msra.mxu0 0.0
    %699 = vmatprep.subr.mxu0 0.0
    %700 = vmatpush1.msra.mxu0 0.0
    %701 = vmatprep.subr.mxu0 0.0
    %702 = vmatpush1.msra.mxu0 0.0
    %703 = vmatprep.subr.mxu0 0.0
    %704 = vmatpush1.msra.mxu0 0.0
    %705 = vmatprep.subr.mxu0 0.0
    %706 = vmatpush1.msra.mxu0 0.0
    %707 = vmatprep.subr.mxu0 0.0
    %708 = vmatpush1.msra.mxu0 0.0
    %709 = vmatprep.subr.mxu0 0.0
    %710 = vmatpush1.msra.mxu0 0.0
    %711 = vmatprep.subr.mxu0 0.0
    %712 = vmatpush1.msra.mxu0 0.0
    %713 = vmatprep.subr.mxu0 0.0
    %714 = vmatpush1.msra.mxu0 0.0
    %715 = vmatprep.subr.mxu0 0.0
    %716 = vmatpush1.msra.mxu0 %v613
    %717 = vmatprep.subr.mxu0 0.0
    %718 = vmatpush2.msra.mxu0 0.0
    %719 = vmatprep.subr.mxu0 0.0
    %720 = vmatpush2.msra.mxu0 0.0
    %721 = vmatprep.subr.mxu0 0.0
    %722 = vmatpush2.msra.mxu0 0.0
    %723 = vmatprep.subr.mxu0 0.0
    %724 = vmatpush2.msra.mxu0 0.0
    %725 = vmatprep.subr.mxu0 0.0
    %726 = vmatpush2.msra.mxu0 0.0
    %727 = vmatprep.subr.mxu0 0.0
    %728 = vmatpush2.msra.mxu0 0.0
    %729 = vmatprep.subr.mxu0 0.0
    %730 = vmatpush2.msra.mxu0 0.0
    %731 = vmatprep.subr.mxu0 0.0
    %732 = vmatpush2.msra.mxu0 0.0
    %733 = vmatprep.subr.mxu0 0.0
    %734 = vmatpush2.msra.mxu0 0.0
    %735 = vmatprep.subr.mxu0 0.0
    %736 = vmatpush2.msra.mxu0 0.0
    %737 = vmatprep.subr.mxu0 0.0
    %738 = vmatpush2.msra.mxu0 0.0
    %739 = vmatprep.subr.mxu0 0.0
    %740 = vmatpush2.msra.mxu0 0.0
    %741 = vmatprep.subr.mxu0 0.0
    %742 = vmatpush2.msra.mxu0 0.0
    %743 = vmatprep.subr.mxu0 0.0
    %744 = vmatpush2.msra.mxu0 0.0
    %745 = vmatprep.subr.mxu0 0.0
    %746 = vmatpush2.msra.mxu0 0.0
    %747 = vmatprep.subr.mxu0 0.0
    %748 = vmatpush2.msra.mxu0 0.0
    %749 = vmatprep.mubr.f32.mxu0 0.0
    %750 = vmatmul.mubr.f32.gmra.mxu0 %v466
    %v751 = vpop.f32.mrf.mxu0
    %v752 = vadd.f32 %v682, %v751
    %v753 = vpop.f32.mrf.mxu0
    %754 = vdwg.mxu0
    %vm755 = vcmask 64512
    %v757 = vsel %vm755, %v13, 0
    %759 = vmatprep.subr.mxu0 0.0
    %760 = vmatpush1.msra.mxu0 0.0
    %761 = vmatprep.subr.mxu0 0.0
    %762 = vmatpush1.msra.mxu0 0.0
    %763 = vmatprep.subr.mxu0 0.0
    %764 = vmatpush1.msra.mxu0 0.0
    %765 = vmatprep.subr.mxu0 0.0
    %766 = vmatpush1.msra.mxu0 0.0
    %767 = vmatprep.subr.mxu0 0.0
    %768 = vmatpush1.msra.mxu0 0.0
    %769 = vmatprep.subr.mxu0 0.0
    %770 = vmatpush1.msra.mxu0 0.0
    %771 = vmatprep.subr.mxu0 0.0
    %772 = vmatpush1.msra.mxu0 0.0
    %773 = vmatprep.subr.mxu0 0.0
    %774 = vmatpush1.msra.mxu0 0.0
    %775 = vmatprep.subr.mxu0 0.0
    %776 = vmatpush1.msra.mxu0 0.0
    %777 = vmatprep.subr.mxu0 0.0
    %778 = vmatpush1.msra.mxu0 0.0
    %779 = vmatprep.subr.mxu0 0.0
    %780 = vmatpush1.msra.mxu0 0.0
    %781 = vmatprep.subr.mxu0 0.0
    %782 = vmatpush1.msra.mxu0 0.0
    %783 = vmatprep.subr.mxu0 0.0
    %784 = vmatpush1.msra.mxu0 0.0
    %785 = vmatprep.subr.mxu0 0.0
    %786 = vmatpush1.msra.mxu0 0.0
    %787 = vmatprep.subr.mxu0 0.0
    %788 = vmatpush1.msra.mxu0 0.0
    %789 = vmatprep.subr.mxu0 0.0
    %790 = vmatpush1.msra.mxu0 %v752
    %791 = vmatprep.subr.mxu0 0.0
    %792 = vmatpush2.msra.mxu0 0.0
    %793 = vmatprep.subr.mxu0 0.0
    %794 = vmatpush2.msra.mxu0 0.0
    %795 = vmatprep.subr.mxu0 0.0
    %796 = vmatpush2.msra.mxu0 0.0
    %797 = vmatprep.subr.mxu0 0.0
    %798 = vmatpush2.msra.mxu0 0.0
    %799 = vmatprep.subr.mxu0 0.0
    %800 = vmatpush2.msra.mxu0 0.0
    %801 = vmatprep.subr.mxu0 0.0
    %802 = vmatpush2.msra.mxu0 0.0
    %803 = vmatprep.subr.mxu0 0.0
    %804 = vmatpush2.msra.mxu0 0.0
    %805 = vmatprep.subr.mxu0 0.0
    %806 = vmatpush2.msra.mxu0 0.0
    %807 = vmatprep.subr.mxu0 0.0
    %808 = vmatpush2.msra.mxu0 0.0
    %809 = vmatprep.subr.mxu0 0.0
    %810 = vmatpush2.msra.mxu0 0.0
    %811 = vmatprep.subr.mxu0 0.0
    %812 = vmatpush2.msra.mxu0 0.0
    %813 = vmatprep.subr.mxu0 0.0
    %814 = vmatpush2.msra.mxu0 0.0
    %815 = vmatprep.subr.mxu0 0.0
    %816 = vmatpush2.msra.mxu0 0.0
    %817 = vmatprep.subr.mxu0 0.0
    %818 = vmatpush2.msra.mxu0 0.0
    %819 = vmatprep.subr.mxu0 0.0
    %820 = vmatpush2.msra.mxu0 0.0
    %821 = vmatprep.subr.mxu0 0.0
    %822 = vmatpush2.msra.mxu0 0.0
    %823 = vmatprep.mubr.f32.mxu0 0.0
    %824 = vmatmul.mubr.f32.gmra.mxu0 %v757
    %v825 = vpop.f32.mrf.mxu0
    %v826 = vadd.f32 0.0, %v825
    %v827 = vpop.f32.mrf.mxu0
    %828 = vdwg.mxu0
    %v830 = vsel %vm755, %v12, 0
    %832 = vmatprep.subr.mxu0 0.0
    %833 = vmatpush1.msra.mxu0 0.0
    %834 = vmatprep.subr.mxu0 0.0
    %835 = vmatpush1.msra.mxu0 0.0
    %836 = vmatprep.subr.mxu0 0.0
    %837 = vmatpush1.msra.mxu0 0.0
    %838 = vmatprep.subr.mxu0 0.0
    %839 = vmatpush1.msra.mxu0 0.0
    %840 = vmatprep.subr.mxu0 0.0
    %841 = vmatpush1.msra.mxu0 0.0
    %842 = vmatprep.subr.mxu0 0.0
    %843 = vmatpush1.msra.mxu0 0.0
    %844 = vmatprep.subr.mxu0 0.0
    %845 = vmatpush1.msra.mxu0 0.0
    %846 = vmatprep.subr.mxu0 0.0
    %847 = vmatpush1.msra.mxu0 0.0
    %848 = vmatprep.subr.mxu0 0.0
    %849 = vmatpush1.msra.mxu0 0.0
    %850 = vmatprep.subr.mxu0 0.0
    %851 = vmatpush1.msra.mxu0 0.0
    %852 = vmatprep.subr.mxu0 0.0
    %853 = vmatpush1.msra.mxu0 0.0
    %854 = vmatprep.subr.mxu0 0.0
    %855 = vmatpush1.msra.mxu0 0.0
    %856 = vmatprep.subr.mxu0 0.0
    %857 = vmatpush1.msra.mxu0 0.0
    %858 = vmatprep.subr.mxu0 0.0
    %859 = vmatpush1.msra.mxu0 0.0
    %860 = vmatprep.subr.mxu0 0.0
    %861 = vmatpush1.msra.mxu0 0.0
    %862 = vmatprep.subr.mxu0 0.0
    %863 = vmatpush1.msra.mxu0 %v609
    %864 = vmatprep.subr.mxu0 0.0
    %865 = vmatpush2.msra.mxu0 0.0
    %866 = vmatprep.subr.mxu0 0.0
    %867 = vmatpush2.msra.mxu0 0.0
    %868 = vmatprep.subr.mxu0 0.0
    %869 = vmatpush2.msra.mxu0 0.0
    %870 = vmatprep.subr.mxu0 0.0
    %871 = vmatpush2.msra.mxu0 0.0
    %872 = vmatprep.subr.mxu0 0.0
    %873 = vmatpush2.msra.mxu0 0.0
    %874 = vmatprep.subr.mxu0 0.0
    %875 = vmatpush2.msra.mxu0 0.0
    %876 = vmatprep.subr.mxu0 0.0
    %877 = vmatpush2.msra.mxu0 0.0
    %878 = vmatprep.subr.mxu0 0.0
    %879 = vmatpush2.msra.mxu0 0.0
    %880 = vmatprep.subr.mxu0 0.0
    %881 = vmatpush2.msra.mxu0 0.0
    %882 = vmatprep.subr.mxu0 0.0
    %883 = vmatpush2.msra.mxu0 0.0
    %884 = vmatprep.subr.mxu0 0.0
    %885 = vmatpush2.msra.mxu0 0.0
    %886 = vmatprep.subr.mxu0 0.0
    %887 = vmatpush2.msra.mxu0 0.0
    %888 = vmatprep.subr.mxu0 0.0
    %889 = vmatpush2.msra.mxu0 0.0
    %890 = vmatprep.subr.mxu0 0.0
    %891 = vmatpush2.msra.mxu0 0.0
    %892 = vmatprep.subr.mxu0 0.0
    %893 = vmatpush2.msra.mxu0 0.0
    %894 = vmatprep.subr.mxu0 0.0
    %895 = vmatpush2.msra.mxu0 0.0
    %896 = vmatprep.mubr.f32.mxu0 0.0
    %897 = vmatmul.mubr.f32.gmra.mxu0 %v830
    %v898 = vpop.f32.mrf.mxu0
    %v899 = vadd.f32 %v826, %v898
    %v900 = vpop.f32.mrf.mxu0
    %901 = vdwg.mxu0
    %v903 = vsel %vm468, %v358, 0
    %905 = vmatprep.subr.mxu0 0.0
    %906 = vmatpush1.msra.mxu0 %v341
    %907 = vmatprep.subr.mxu0 0.0
    %908 = vmatpush1.msra.mxu0 %v340
    %909 = vmatprep.subr.mxu0 0.0
    %910 = vmatpush1.msra.mxu0 %v339
    %911 = vmatprep.subr.mxu0 0.0
    %912 = vmatpush1.msra.mxu0 %v338
    %913 = vmatprep.subr.mxu0 0.0
    %914 = vmatpush1.msra.mxu0 %v337
    %915 = vmatprep.subr.mxu0 0.0
    %916 = vmatpush1.msra.mxu0 %v336
    %917 = vmatprep.subr.mxu0 0.0
    %918 = vmatpush1.msra.mxu0 %v335
    %919 = vmatprep.subr.mxu0 0.0
    %920 = vmatpush1.msra.mxu0 %v334
    %921 = vmatprep.subr.mxu0 0.0
    %922 = vmatpush1.msra.mxu0 %v333
    %923 = vmatprep.subr.mxu0 0.0
    %924 = vmatpush1.msra.mxu0 %v332
    %925 = vmatprep.subr.mxu0 0.0
    %926 = vmatpush1.msra.mxu0 %v331
    %927 = vmatprep.subr.mxu0 0.0
    %928 = vmatpush1.msra.mxu0 %v330
    %929 = vmatprep.subr.mxu0 0.0
    %930 = vmatpush1.msra.mxu0 %v329
    %931 = vmatprep.subr.mxu0 0.0
    %932 = vmatpush1.msra.mxu0 %v328
    %933 = vmatprep.subr.mxu0 0.0
    %934 = vmatpush1.msra.mxu0 %v327
    %935 = vmatprep.subr.mxu0 0.0
    %936 = vmatpush1.msra.mxu0 %v326
    %937 = vmatprep.subr.mxu0 0.0
    %938 = vmatpush2.msra.mxu0 %v357
    %939 = vmatprep.subr.mxu0 0.0
    %940 = vmatpush2.msra.mxu0 %v356
    %941 = vmatprep.subr.mxu0 0.0
    %942 = vmatpush2.msra.mxu0 %v355
    %943 = vmatprep.subr.mxu0 0.0
    %944 = vmatpush2.msra.mxu0 %v354
    %945 = vmatprep.subr.mxu0 0.0
    %946 = vmatpush2.msra.mxu0 %v353
    %947 = vmatprep.subr.mxu0 0.0
    %948 = vmatpush2.msra.mxu0 %v352
    %949 = vmatprep.subr.mxu0 0.0
    %950 = vmatpush2.msra.mxu0 %v351
    %951 = vmatprep.subr.mxu0 0.0
    %952 = vmatpush2.msra.mxu0 %v350
    %953 = vmatprep.subr.mxu0 0.0
    %954 = vmatpush2.msra.mxu0 %v349
    %955 = vmatprep.subr.mxu0 0.0
    %956 = vmatpush2.msra.mxu0 %v348
    %957 = vmatprep.subr.mxu0 0.0
    %958 = vmatpush2.msra.mxu0 %v347
    %959 = vmatprep.subr.mxu0 0.0
    %960 = vmatpush2.msra.mxu0 %v346
    %961 = vmatprep.subr.mxu0 0.0
    %962 = vmatpush2.msra.mxu0 %v345
    %963 = vmatprep.subr.mxu0 0.0
    %964 = vmatpush2.msra.mxu0 %v344
    %965 = vmatprep.subr.mxu0 0.0
    %966 = vmatpush2.msra.mxu0 %v343
    %967 = vmatprep.subr.mxu0 0.0
    %968 = vmatpush2.msra.mxu0 %v342
    %969 = vmatprep.mubr.f32.mxu0 %v462
    %970 = vmatmul.mubr.f32.gmra.mxu0 %v461
    %v971 = vpop.f32.mrf.mxu0
    %v972 = vadd.f32 0.0, %v971
    %v973 = vpop.f32.mrf.mxu0
    %974 = vdwg.mxu0
    %975 = vmatprep.subr.mxu0 0.0
    %976 = vmatpush1.msra.mxu0 0.0
    %977 = vmatprep.subr.mxu0 0.0
    %978 = vmatpush1.msra.mxu0 0.0
    %979 = vmatprep.subr.mxu0 0.0
    %980 = vmatpush1.msra.mxu0 0.0
    %981 = vmatprep.subr.mxu0 0.0
    %982 = vmatpush1.msra.mxu0 0.0
    %983 = vmatprep.subr.mxu0 0.0
    %984 = vmatpush1.msra.mxu0 0.0
    %985 = vmatprep.subr.mxu0 0.0
    %986 = vmatpush1.msra.mxu0 0.0
    %987 = vmatprep.subr.mxu0 0.0
    %988 = vmatpush1.msra.mxu0 0.0
    %989 = vmatprep.subr.mxu0 0.0
    %990 = vmatpush1.msra.mxu0 0.0
    %991 = vmatprep.subr.mxu0 0.0
    %992 = vmatpush1.msra.mxu0 0.0
    %993 = vmatprep.subr.mxu0 0.0
    %994 = vmatpush1.msra.mxu0 0.0
    %995 = vmatprep.subr.mxu0 0.0
    %996 = vmatpush1.msra.mxu0 0.0
    %997 = vmatprep.subr.mxu0 0.0
    %998 = vmatpush1.msra.mxu0 0.0
    %999 = vmatprep.subr.mxu0 0.0
    %1000 = vmatpush1.msra.mxu0 0.0
    %1001 = vmatprep.subr.mxu0 0.0
    %1002 = vmatpush1.msra.mxu0 0.0
    %1003 = vmatprep.subr.mxu0 0.0
    %1004 = vmatpush1.msra.mxu0 0.0
    %1005 = vmatprep.subr.mxu0 0.0
    %1006 = vmatpush1.msra.mxu0 %v903
    %1007 = vmatprep.subr.mxu0 0.0
    %1008 = vmatpush2.msra.mxu0 0.0
    %1009 = vmatprep.subr.mxu0 0.0
    %1010 = vmatpush2.msra.mxu0 0.0
    %1011 = vmatprep.subr.mxu0 0.0
    %1012 = vmatpush2.msra.mxu0 0.0
    %1013 = vmatprep.subr.mxu0 0.0
    %1014 = vmatpush2.msra.mxu0 0.0
    %1015 = vmatprep.subr.mxu0 0.0
    %1016 = vmatpush2.msra.mxu0 0.0
    %1017 = vmatprep.subr.mxu0 0.0
    %1018 = vmatpush2.msra.mxu0 0.0
    %1019 = vmatprep.subr.mxu0 0.0
    %1020 = vmatpush2.msra.mxu0 0.0
    %1021 = vmatprep.subr.mxu0 0.0
    %1022 = vmatpush2.msra.mxu0 0.0
    %1023 = vmatprep.subr.mxu0 0.0
    %1024 = vmatpush2.msra.mxu0 0.0
    %1025 = vmatprep.subr.mxu0 0.0
    %1026 = vmatpush2.msra.mxu0 0.0
    %1027 = vmatprep.subr.mxu0 0.0
    %1028 = vmatpush2.msra.mxu0 0.0
    %1029 = vmatprep.subr.mxu0 0.0
    %1030 = vmatpush2.msra.mxu0 0.0
    %1031 = vmatprep.subr.mxu0 0.0
    %1032 = vmatpush2.msra.mxu0 0.0
    %1033 = vmatprep.subr.mxu0 0.0
    %1034 = vmatpush2.msra.mxu0 0.0
    %1035 = vmatprep.subr.mxu0 0.0
    %1036 = vmatpush2.msra.mxu0 0.0
    %1037 = vmatprep.subr.mxu0 0.0
    %1038 = vmatpush2.msra.mxu0 0.0
    %1039 = vmatprep.mubr.f32.mxu0 0.0
    %1040 = vmatmul.mubr.f32.gmra.mxu0 %v466
    %v1041 = vpop.f32.mrf.mxu0
    %v1042 = vadd.f32 %v972, %v1041
    %v1043 = vpop.f32.mrf.mxu0
    %1044 = vdwg.mxu0
    %v1046 = vsel %vm755, %v14, 0
    %1048 = vmatprep.subr.mxu0 0.0
    %1049 = vmatpush1.msra.mxu0 0.0
    %1050 = vmatprep.subr.mxu0 0.0
    %1051 = vmatpush1.msra.mxu0 0.0
    %1052 = vmatprep.subr.mxu0 0.0
    %1053 = vmatpush1.msra.mxu0 0.0
    %1054 = vmatprep.subr.mxu0 0.0
    %1055 = vmatpush1.msra.mxu0 0.0
    %1056 = vmatprep.subr.mxu0 0.0
    %1057 = vmatpush1.msra.mxu0 0.0
    %1058 = vmatprep.subr.mxu0 0.0
    %1059 = vmatpush1.msra.mxu0 0.0
    %1060 = vmatprep.subr.mxu0 0.0
    %1061 = vmatpush1.msra.mxu0 0.0
    %1062 = vmatprep.subr.mxu0 0.0
    %1063 = vmatpush1.msra.mxu0 0.0
    %1064 = vmatprep.subr.mxu0 0.0
    %1065 = vmatpush1.msra.mxu0 0.0
    %1066 = vmatprep.subr.mxu0 0.0
    %1067 = vmatpush1.msra.mxu0 0.0
    %1068 = vmatprep.subr.mxu0 0.0
    %1069 = vmatpush1.msra.mxu0 0.0
    %1070 = vmatprep.subr.mxu0 0.0
    %1071 = vmatpush1.msra.mxu0 0.0
    %1072 = vmatprep.subr.mxu0 0.0
    %1073 = vmatpush1.msra.mxu0 0.0
    %1074 = vmatprep.subr.mxu0 0.0
    %1075 = vmatpush1.msra.mxu0 0.0
    %1076 = vmatprep.subr.mxu0 0.0
    %1077 = vmatpush1.msra.mxu0 0.0
    %1078 = vmatprep.subr.mxu0 0.0
    %1079 = vmatpush1.msra.mxu0 %v1042
    %1080 = vmatprep.subr.mxu0 0.0
    %1081 = vmatpush2.msra.mxu0 0.0
    %1082 = vmatprep.subr.mxu0 0.0
    %1083 = vmatpush2.msra.mxu0 0.0
    %1084 = vmatprep.subr.mxu0 0.0
    %1085 = vmatpush2.msra.mxu0 0.0
    %1086 = vmatprep.subr.mxu0 0.0
    %1087 = vmatpush2.msra.mxu0 0.0
    %1088 = vmatprep.subr.mxu0 0.0
    %1089 = vmatpush2.msra.mxu0 0.0
    %1090 = vmatprep.subr.mxu0 0.0
    %1091 = vmatpush2.msra.mxu0 0.0
    %1092 = vmatprep.subr.mxu0 0.0
    %1093 = vmatpush2.msra.mxu0 0.0
    %1094 = vmatprep.subr.mxu0 0.0
    %1095 = vmatpush2.msra.mxu0 0.0
    %1096 = vmatprep.subr.mxu0 0.0
    %1097 = vmatpush2.msra.mxu0 0.0
    %1098 = vmatprep.subr.mxu0 0.0
    %1099 = vmatpush2.msra.mxu0 0.0
    %1100 = vmatprep.subr.mxu0 0.0
    %1101 = vmatpush2.msra.mxu0 0.0
    %1102 = vmatprep.subr.mxu0 0.0
    %1103 = vmatpush2.msra.mxu0 0.0
    %1104 = vmatprep.subr.mxu0 0.0
    %1105 = vmatpush2.msra.mxu0 0.0
    %1106 = vmatprep.subr.mxu0 0.0
    %1107 = vmatpush2.msra.mxu0 0.0
    %1108 = vmatprep.subr.mxu0 0.0
    %1109 = vmatpush2.msra.mxu0 0.0
    %1110 = vmatprep.subr.mxu0 0.0
    %1111 = vmatpush2.msra.mxu0 0.0
    %1112 = vmatprep.mubr.f32.mxu0 0.0
    %1113 = vmatmul.mubr.f32.gmra.mxu0 %v1046
    %v1114 = vpop.f32.mrf.mxu0
    %v1115 = vadd.f32 0.0, %v1114
    %v1116 = vpop.f32.mrf.mxu0
    %1117 = vdwg.mxu0
    %v1118 = vadd.f32 %v899, %v1115
    %v1120 = vsel %vm468, %v458, 0
    %1122 = vmatprep.subr.mxu0 0.0
    %1123 = vmatpush1.msra.mxu0 %v441
    %1124 = vmatprep.subr.mxu0 0.0
    %1125 = vmatpush1.msra.mxu0 %v440
    %1126 = vmatprep.subr.mxu0 0.0
    %1127 = vmatpush1.msra.mxu0 %v439
    %1128 = vmatprep.subr.mxu0 0.0
    %1129 = vmatpush1.msra.mxu0 %v438
    %1130 = vmatprep.subr.mxu0 0.0
    %1131 = vmatpush1.msra.mxu0 %v437
    %1132 = vmatprep.subr.mxu0 0.0
    %1133 = vmatpush1.msra.mxu0 %v436
    %1134 = vmatprep.subr.mxu0 0.0
    %1135 = vmatpush1.msra.mxu0 %v435
    %1136 = vmatprep.subr.mxu0 0.0
    %1137 = vmatpush1.msra.mxu0 %v434
    %1138 = vmatprep.subr.mxu0 0.0
    %1139 = vmatpush1.msra.mxu0 %v433
    %1140 = vmatprep.subr.mxu0 0.0
    %1141 = vmatpush1.msra.mxu0 %v432
    %1142 = vmatprep.subr.mxu0 0.0
    %1143 = vmatpush1.msra.mxu0 %v431
    %1144 = vmatprep.subr.mxu0 0.0
    %1145 = vmatpush1.msra.mxu0 %v430
    %1146 = vmatprep.subr.mxu0 0.0
    %1147 = vmatpush1.msra.mxu0 %v429
    %1148 = vmatprep.subr.mxu0 0.0
    %1149 = vmatpush1.msra.mxu0 %v428
    %1150 = vmatprep.subr.mxu0 0.0
    %1151 = vmatpush1.msra.mxu0 %v427
    %1152 = vmatprep.subr.mxu0 0.0
    %1153 = vmatpush1.msra.mxu0 %v426
    %1154 = vmatprep.subr.mxu0 0.0
    %1155 = vmatpush2.msra.mxu0 %v457
    %1156 = vmatprep.subr.mxu0 0.0
    %1157 = vmatpush2.msra.mxu0 %v456
    %1158 = vmatprep.subr.mxu0 0.0
    %1159 = vmatpush2.msra.mxu0 %v455
    %1160 = vmatprep.subr.mxu0 0.0
    %1161 = vmatpush2.msra.mxu0 %v454
    %1162 = vmatprep.subr.mxu0 0.0
    %1163 = vmatpush2.msra.mxu0 %v453
    %1164 = vmatprep.subr.mxu0 0.0
    %1165 = vmatpush2.msra.mxu0 %v452
    %1166 = vmatprep.subr.mxu0 0.0
    %1167 = vmatpush2.msra.mxu0 %v451
    %1168 = vmatprep.subr.mxu0 0.0
    %1169 = vmatpush2.msra.mxu0 %v450
    %1170 = vmatprep.subr.mxu0 0.0
    %1171 = vmatpush2.msra.mxu0 %v449
    %1172 = vmatprep.subr.mxu0 0.0
    %1173 = vmatpush2.msra.mxu0 %v448
    %1174 = vmatprep.subr.mxu0 0.0
    %1175 = vmatpush2.msra.mxu0 %v447
    %1176 = vmatprep.subr.mxu0 0.0
    %1177 = vmatpush2.msra.mxu0 %v446
    %1178 = vmatprep.subr.mxu0 0.0
    %1179 = vmatpush2.msra.mxu0 %v445
    %1180 = vmatprep.subr.mxu0 0.0
    %1181 = vmatpush2.msra.mxu0 %v444
    %1182 = vmatprep.subr.mxu0 0.0
    %1183 = vmatpush2.msra.mxu0 %v443
    %1184 = vmatprep.subr.mxu0 0.0
    %1185 = vmatpush2.msra.mxu0 %v442
    %1186 = vmatprep.mubr.f32.mxu0 %v462
    %1187 = vmatmul.mubr.f32.gmra.mxu0 %v461
    %v1188 = vpop.f32.mrf.mxu0
    %v1189 = vadd.f32 0.0, %v1188
    %v1190 = vpop.f32.mrf.mxu0
    %1191 = vdwg.mxu0
    %1192 = vmatprep.subr.mxu0 0.0
    %1193 = vmatpush1.msra.mxu0 0.0
    %1194 = vmatprep.subr.mxu0 0.0
    %1195 = vmatpush1.msra.mxu0 0.0
    %1196 = vmatprep.subr.mxu0 0.0
    %1197 = vmatpush1.msra.mxu0 0.0
    %1198 = vmatprep.subr.mxu0 0.0
    %1199 = vmatpush1.msra.mxu0 0.0
    %1200 = vmatprep.subr.mxu0 0.0
    %1201 = vmatpush1.msra.mxu0 0.0
    %1202 = vmatprep.subr.mxu0 0.0
    %1203 = vmatpush1.msra.mxu0 0.0
    %1204 = vmatprep.subr.mxu0 0.0
    %1205 = vmatpush1.msra.mxu0 0.0
    %1206 = vmatprep.subr.mxu0 0.0
    %1207 = vmatpush1.msra.mxu0 0.0
    %1208 = vmatprep.subr.mxu0 0.0
    %1209 = vmatpush1.msra.mxu0 0.0
    %1210 = vmatprep.subr.mxu0 0.0
    %1211 = vmatpush1.msra.mxu0 0.0
    %1212 = vmatprep.subr.mxu0 0.0
    %1213 = vmatpush1.msra.mxu0 0.0
    %1214 = vmatprep.subr.mxu0 0.0
    %1215 = vmatpush1.msra.mxu0 0.0
    %1216 = vmatprep.subr.mxu0 0.0
    %1217 = vmatpush1.msra.mxu0 0.0
    %1218 = vmatprep.subr.mxu0 0.0
    %1219 = vmatpush1.msra.mxu0 0.0
    %1220 = vmatprep.subr.mxu0 0.0
    %1221 = vmatpush1.msra.mxu0 0.0
    %1222 = vmatprep.subr.mxu0 0.0
    %1223 = vmatpush1.msra.mxu0 %v1120
    %1224 = vmatprep.subr.mxu0 0.0
    %1225 = vmatpush2.msra.mxu0 0.0
    %1226 = vmatprep.subr.mxu0 0.0
    %1227 = vmatpush2.msra.mxu0 0.0
    %1228 = vmatprep.subr.mxu0 0.0
    %1229 = vmatpush2.msra.mxu0 0.0
    %1230 = vmatprep.subr.mxu0 0.0
    %1231 = vmatpush2.msra.mxu0 0.0
    %1232 = vmatprep.subr.mxu0 0.0
    %1233 = vmatpush2.msra.mxu0 0.0
    %1234 = vmatprep.subr.mxu0 0.0
    %1235 = vmatpush2.msra.mxu0 0.0
    %1236 = vmatprep.subr.mxu0 0.0
    %1237 = vmatpush2.msra.mxu0 0.0
    %1238 = vmatprep.subr.mxu0 0.0
    %1239 = vmatpush2.msra.mxu0 0.0
    %1240 = vmatprep.subr.mxu0 0.0
    %1241 = vmatpush2.msra.mxu0 0.0
    %1242 = vmatprep.subr.mxu0 0.0
    %1243 = vmatpush2.msra.mxu0 0.0
    %1244 = vmatprep.subr.mxu0 0.0
    %1245 = vmatpush2.msra.mxu0 0.0
    %1246 = vmatprep.subr.mxu0 0.0
    %1247 = vmatpush2.msra.mxu0 0.0
    %1248 = vmatprep.subr.mxu0 0.0
    %1249 = vmatpush2.msra.mxu0 0.0
    %1250 = vmatprep.subr.mxu0 0.0
    %1251 = vmatpush2.msra.mxu0 0.0
    %1252 = vmatprep.subr.mxu0 0.0
    %1253 = vmatpush2.msra.mxu0 0.0
    %1254 = vmatprep.subr.mxu0 0.0
    %1255 = vmatpush2.msra.mxu0 0.0
    %1256 = vmatprep.mubr.f32.mxu0 0.0
    %1257 = vmatmul.mubr.f32.gmra.mxu0 %v466
    %v1258 = vpop.f32.mrf.mxu0
    %v1259 = vadd.f32 %v1189, %v1258
    %v1260 = vpop.f32.mrf.mxu0
    %1261 = vdwg.mxu0
    %v1263 = vsel %vm755, %v15, 0
    %1265 = vmatprep.subr.mxu0 0.0
    %1266 = vmatpush1.msra.mxu0 0.0
    %1267 = vmatprep.subr.mxu0 0.0
    %1268 = vmatpush1.msra.mxu0 0.0
    %1269 = vmatprep.subr.mxu0 0.0
    %1270 = vmatpush1.msra.mxu0 0.0
    %1271 = vmatprep.subr.mxu0 0.0
    %1272 = vmatpush1.msra.mxu0 0.0
    %1273 = vmatprep.subr.mxu0 0.0
    %1274 = vmatpush1.msra.mxu0 0.0
    %1275 = vmatprep.subr.mxu0 0.0
    %1276 = vmatpush1.msra.mxu0 0.0
    %1277 = vmatprep.subr.mxu0 0.0
    %1278 = vmatpush1.msra.mxu0 0.0
    %1279 = vmatprep.subr.mxu0 0.0
    %1280 = vmatpush1.msra.mxu0 0.0
    %1281 = vmatprep.subr.mxu0 0.0
    %1282 = vmatpush1.msra.mxu0 0.0
    %1283 = vmatprep.subr.mxu0 0.0
    %1284 = vmatpush1.msra.mxu0 0.0
    %1285 = vmatprep.subr.mxu0 0.0
    %1286 = vmatpush1.msra.mxu0 0.0
    %1287 = vmatprep.subr.mxu0 0.0
    %1288 = vmatpush1.msra.mxu0 0.0
    %1289 = vmatprep.subr.mxu0 0.0
    %1290 = vmatpush1.msra.mxu0 0.0
    %1291 = vmatprep.subr.mxu0 0.0
    %1292 = vmatpush1.msra.mxu0 0.0
    %1293 = vmatprep.subr.mxu0 0.0
    %1294 = vmatpush1.msra.mxu0 0.0
    %1295 = vmatprep.subr.mxu0 0.0
    %1296 = vmatpush1.msra.mxu0 %v1259
    %1297 = vmatprep.subr.mxu0 0.0
    %1298 = vmatpush2.msra.mxu0 0.0
    %1299 = vmatprep.subr.mxu0 0.0
    %1300 = vmatpush2.msra.mxu0 0.0
    %1301 = vmatprep.subr.mxu0 0.0
    %1302 = vmatpush2.msra.mxu0 0.0
    %1303 = vmatprep.subr.mxu0 0.0
    %1304 = vmatpush2.msra.mxu0 0.0
    %1305 = vmatprep.subr.mxu0 0.0
    %1306 = vmatpush2.msra.mxu0 0.0
    %1307 = vmatprep.subr.mxu0 0.0
    %1308 = vmatpush2.msra.mxu0 0.0
    %1309 = vmatprep.subr.mxu0 0.0
    %1310 = vmatpush2.msra.mxu0 0.0
    %1311 = vmatprep.subr.mxu0 0.0
    %1312 = vmatpush2.msra.mxu0 0.0
    %1313 = vmatprep.subr.mxu0 0.0
    %1314 = vmatpush2.msra.mxu0 0.0
    %1315 = vmatprep.subr.mxu0 0.0
    %1316 = vmatpush2.msra.mxu0 0.0
    %1317 = vmatprep.subr.mxu0 0.0
    %1318 = vmatpush2.msra.mxu0 0.0
    %1319 = vmatprep.subr.mxu0 0.0
    %1320 = vmatpush2.msra.mxu0 0.0
    %1321 = vmatprep.subr.mxu0 0.0
    %1322 = vmatpush2.msra.mxu0 0.0
    %1323 = vmatprep.subr.mxu0 0.0
    %1324 = vmatpush2.msra.mxu0 0.0
    %1325 = vmatprep.subr.mxu0 0.0
    %1326 = vmatpush2.msra.mxu0 0.0
    %1327 = vmatprep.subr.mxu0 0.0
    %1328 = vmatpush2.msra.mxu0 0.0
    %1329 = vmatprep.mubr.f32.mxu0 0.0
    %1330 = vmatmul.mubr.f32.gmra.mxu0 %v1263
    %v1331 = vpop.f32.mrf.mxu0
    %v1332 = vadd.f32 0.0, %v1331
    %v1333 = vpop.f32.mrf.mxu0
    %1334 = vdwg.mxu0
    %v1335 = vadd.f32 %v1118, %v1332
    %1337 = vset.pattern.permute.xlu0 5
    %1338 = vperm.xlu0 %1337, %v20
    %v1339 = vpop.permute.xlu0 %1338
    %v1341 = vadd.f32 %v1335, %v1339
    %v1342 = vmax.f32 %v1341, 0.0
    %1344 = vset.pattern.permute.xlu0 0
    %1345 = vperm.xlu0 %1344, %v21
    %v1346 = vpop.permute.xlu0 %1345
    %1349 = vset.pattern.permute.xlu0 0
    %1350 = vperm.xlu0 %1349, %v22
    %v1351 = vpop.permute.xlu0 %1350
    %v1354 = vsel %vm755, %v16, 0
    %v1357 = vsel %vm755, %v17, 0
    %1359 = vmatprep.subr.mxu0 0.0
    %1360 = vmatpush1.msra.mxu0 0.0
    %1361 = vmatprep.subr.mxu0 0.0
    %1362 = vmatpush1.msra.mxu0 0.0
    %1363 = vmatprep.subr.mxu0 0.0
    %1364 = vmatpush1.msra.mxu0 0.0
    %1365 = vmatprep.subr.mxu0 0.0
    %1366 = vmatpush1.msra.mxu0 0.0
    %1367 = vmatprep.subr.mxu0 0.0
    %1368 = vmatpush1.msra.mxu0 0.0
    %1369 = vmatprep.subr.mxu0 0.0
    %1370 = vmatpush1.msra.mxu0 0.0
    %1371 = vmatprep.subr.mxu0 0.0
    %1372 = vmatpush1.msra.mxu0 0.0
    %1373 = vmatprep.subr.mxu0 0.0
    %1374 = vmatpush1.msra.mxu0 0.0
    %1375 = vmatprep.subr.mxu0 0.0
    %1376 = vmatpush1.msra.mxu0 0.0
    %1377 = vmatprep.subr.mxu0 0.0
    %1378 = vmatpush1.msra.mxu0 0.0
    %1379 = vmatprep.subr.mxu0 0.0
    %1380 = vmatpush1.msra.mxu0 0.0
    %1381 = vmatprep.subr.mxu0 0.0
    %1382 = vmatpush1.msra.mxu0 0.0
    %1383 = vmatprep.subr.mxu0 0.0
    %1384 = vmatpush1.msra.mxu0 0.0
    %1385 = vmatprep.subr.mxu0 0.0
    %1386 = vmatpush1.msra.mxu0 0.0
    %1387 = vmatprep.subr.mxu0 0.0
    %1388 = vmatpush1.msra.mxu0 0.0
    %1389 = vmatprep.subr.mxu0 0.0
    %1390 = vmatpush1.msra.mxu0 %v1342
    %1391 = vmatprep.subr.mxu0 0.0
    %1392 = vmatpush2.msra.mxu0 0.0
    %1393 = vmatprep.subr.mxu0 0.0
    %1394 = vmatpush2.msra.mxu0 0.0
    %1395 = vmatprep.subr.mxu0 0.0
    %1396 = vmatpush2.msra.mxu0 0.0
    %1397 = vmatprep.subr.mxu0 0.0
    %1398 = vmatpush2.msra.mxu0 0.0
    %1399 = vmatprep.subr.mxu0 0.0
    %1400 = vmatpush2.msra.mxu0 0.0
    %1401 = vmatprep.subr.mxu0 0.0
    %1402 = vmatpush2.msra.mxu0 0.0
    %1403 = vmatprep.subr.mxu0 0.0
    %1404 = vmatpush2.msra.mxu0 0.0
    %1405 = vmatprep.subr.mxu0 0.0
    %1406 = vmatpush2.msra.mxu0 0.0
    %1407 = vmatprep.subr.mxu0 0.0
    %1408 = vmatpush2.msra.mxu0 0.0
    %1409 = vmatprep.subr.mxu0 0.0
    %1410 = vmatpush2.msra.mxu0 0.0
    %1411 = vmatprep.subr.mxu0 0.0
    %1412 = vmatpush2.msra.mxu0 0.0
    %1413 = vmatprep.subr.mxu0 0.0
    %1414 = vmatpush2.msra.mxu0 0.0
    %1415 = vmatprep.subr.mxu0 0.0
    %1416 = vmatpush2.msra.mxu0 0.0
    %1417 = vmatprep.subr.mxu0 0.0
    %1418 = vmatpush2.msra.mxu0 0.0
    %1419 = vmatprep.subr.mxu0 0.0
    %1420 = vmatpush2.msra.mxu0 0.0
    %1421 = vmatprep.subr.mxu0 0.0
    %1422 = vmatpush2.msra.mxu0 0.0
    %1423 = vmatprep.mubr.f32.mxu0 0.0
    %1424 = vmatmul.mubr.f32.gmra.mxu0 %v1354
    %v1425 = vpop.f32.mrf.mxu0
    %v1426 = vadd.f32 %v1346, %v1425
    %v1427 = vpop.f32.mrf.mxu0
    %1428 = vmatprep.mubr.f32.mxu0 0.0
    %1429 = vmatmul.mubr.f32.gmra.mxu0 %v1357
    %v1430 = vpop.f32.mrf.mxu0
    %v1431 = vadd.f32 %v1351, %v1430
    %v1432 = vpop.f32.mrf.mxu0
    %1433 = vdwg.mxu0
    %v1434 = vxor.u32 %v1431, 2147483648
    %v1435 = vmul.f32 %v1434, 1.442695
    %v1436 = vpow.pop %v1435
    %v1437 = vadd.f32 %v1436, 1.0
    %v1438 = vrcp.pop %v1437
    %v1439 = vmul.f32 1.0, %v1438
    %v1440 = vmul.f32 %v1426, %v1439
    %1441 = vrot.lane.b32.xlu0 %v1440, 1
    %v1442 = vpop.permute.xlu0 %1441
    %v1443 = vsel %vm459, 1, 0
    %vm1444 = vcmp.eq.s32.totalorder %v1443, 1
    %v1445 = vsel %vm1444, %v1442, 0.0
    %1446 = vrot.lane.b32.xlu0 %v1440, 127
    %v1447 = vpop.permute.xlu0 %1446
    %v1448 = vsel %vm460, 1, 0
    %vm1449 = vcmp.eq.s32.totalorder %v1448, 1
    %v1450 = vsel %vm1449, %v1447, 0.0
    %1451 = vset.pattern.permute.xlu0 0
    %1452 = vperm.xlu0 %1451, %v20
    %v1453 = vpop.permute.xlu0 %1452
    %v1455 = vmul.f32 %v1453, %v1445
    %1456 = vset.pattern.permute.xlu0 1
    %1457 = vperm.xlu0 %1456, %v20
    %v1458 = vpop.permute.xlu0 %1457
    %v1460 = vmul.f32 %v1458, %v1440
    %v1461 = vadd.f32 %v1455, %v1460
    %1462 = vset.pattern.permute.xlu0 2
    %1463 = vperm.xlu0 %1462, %v20
    %v1464 = vpop.permute.xlu0 %1463
    %v1466 = vmul.f32 %v1464, %v1450
    %v1467 = vadd.f32 %v1461, %v1466
    %1468 = vset.pattern.permute.xlu0 4
    %1469 = vperm.xlu0 %1468, %v20
    %v1470 = vpop.permute.xlu0 %1469
    %v1472 = vadd.f32 %v1467, %v1470
    %v1473 = vmax.f32 %v1472, 0.0
    %v1474 = vmin.f32 %v1472, 0.0
    %1475 = vset.pattern.permute.xlu0 3
    %1476 = vperm.xlu0 %1475, %v20
    %v1477 = vpop.permute.xlu0 %1476
    %v1479 = vmul.f32 %v1477, %v1474
    %v1480 = vadd.f32 %v1473, %v1479
    %1481 = vset.pattern.permute.xlu0 1
    %1482 = vperm.xlu0 %1481, %v21
    %v1483 = vpop.permute.xlu0 %1482
    %1485 = vset.pattern.permute.xlu0 1
    %1486 = vperm.xlu0 %1485, %v22
    %v1487 = vpop.permute.xlu0 %1486
    %v1490 = vsel %vm755, %v18, 0
    %v1493 = vsel %vm755, %v19, 0
    %1495 = vmatprep.subr.mxu0 0.0
    %1496 = vmatpush1.msra.mxu0 0.0
    %1497 = vmatprep.subr.mxu0 0.0
    %1498 = vmatpush1.msra.mxu0 0.0
    %1499 = vmatprep.subr.mxu0 0.0
    %1500 = vmatpush1.msra.mxu0 0.0
    %1501 = vmatprep.subr.mxu0 0.0
    %1502 = vmatpush1.msra.mxu0 0.0
    %1503 = vmatprep.subr.mxu0 0.0
    %1504 = vmatpush1.msra.mxu0 0.0
    %1505 = vmatprep.subr.mxu0 0.0
    %1506 = vmatpush1.msra.mxu0 0.0
    %1507 = vmatprep.subr.mxu0 0.0
    %1508 = vmatpush1.msra.mxu0 0.0
    %1509 = vmatprep.subr.mxu0 0.0
    %1510 = vmatpush1.msra.mxu0 0.0
    %1511 = vmatprep.subr.mxu0 0.0
    %1512 = vmatpush1.msra.mxu0 0.0
    %1513 = vmatprep.subr.mxu0 0.0
    %1514 = vmatpush1.msra.mxu0 0.0
    %1515 = vmatprep.subr.mxu0 0.0
    %1516 = vmatpush1.msra.mxu0 0.0
    %1517 = vmatprep.subr.mxu0 0.0
    %1518 = vmatpush1.msra.mxu0 0.0
    %1519 = vmatprep.subr.mxu0 0.0
    %1520 = vmatpush1.msra.mxu0 0.0
    %1521 = vmatprep.subr.mxu0 0.0
    %1522 = vmatpush1.msra.mxu0 0.0
    %1523 = vmatprep.subr.mxu0 0.0
    %1524 = vmatpush1.msra.mxu0 0.0
    %1525 = vmatprep.subr.mxu0 0.0
    %1526 = vmatpush1.msra.mxu0 %v1480
    %1527 = vmatprep.subr.mxu0 0.0
    %1528 = vmatpush2.msra.mxu0 0.0
    %1529 = vmatprep.subr.mxu0 0.0
    %1530 = vmatpush2.msra.mxu0 0.0
    %1531 = vmatprep.subr.mxu0 0.0
    %1532 = vmatpush2.msra.mxu0 0.0
    %1533 = vmatprep.subr.mxu0 0.0
    %1534 = vmatpush2.msra.mxu0 0.0
    %1535 = vmatprep.subr.mxu0 0.0
    %1536 = vmatpush2.msra.mxu0 0.0
    %1537 = vmatprep.subr.mxu0 0.0
    %1538 = vmatpush2.msra.mxu0 0.0
    %1539 = vmatprep.subr.mxu0 0.0
    %1540 = vmatpush2.msra.mxu0 0.0
    %1541 = vmatprep.subr.mxu0 0.0
    %1542 = vmatpush2.msra.mxu0 0.0
    %1543 = vmatprep.subr.mxu0 0.0
    %1544 = vmatpush2.msra.mxu0 0.0
    %1545 = vmatprep.subr.mxu0 0.0
    %1546 = vmatpush2.msra.mxu0 0.0
    %1547 = vmatprep.subr.mxu0 0.0
    %1548 = vmatpush2.msra.mxu0 0.0
    %1549 = vmatprep.subr.mxu0 0.0
    %1550 = vmatpush2.msra.mxu0 0.0
    %1551 = vmatprep.subr.mxu0 0.0
    %1552 = vmatpush2.msra.mxu0 0.0
    %1553 = vmatprep.subr.mxu0 0.0
    %1554 = vmatpush2.msra.mxu0 0.0
    %1555 = vmatprep.subr.mxu0 0.0
    %1556 = vmatpush2.msra.mxu0 0.0
    %1557 = vmatprep.subr.mxu0 0.0
    %1558 = vmatpush2.msra.mxu0 0.0
    %1559 = vmatprep.mubr.f32.mxu0 0.0
    %1560 = vmatmul.mubr.f32.gmra.mxu0 %v1490
    %v1561 = vpop.f32.mrf.mxu0
    %v1562 = vadd.f32 %v1483, %v1561
    %v1563 = vpop.f32.mrf.mxu0
    %1564 = vmatprep.mubr.f32.mxu0 0.0
    %1565 = vmatmul.mubr.f32.gmra.mxu0 %v1493
    %v1566 = vpop.f32.mrf.mxu0
    %v1567 = vadd.f32 %v1487, %v1566
    %v1568 = vpop.f32.mrf.mxu0
    %1569 = vdwg.mxu0
    %v1570 = vxor.u32 %v1567, 2147483648
    %v1571 = vmul.f32 %v1570, 1.442695
    %v1572 = vpow.pop %v1571
    %v1573 = vadd.f32 %v1572, 1.0
    %v1574 = vrcp.pop %v1573
    %v1575 = vmul.f32 1.0, %v1574
    %v1576 = vmul.f32 %v1562, %v1575
    %v1577 = vadd.f32 %v1576, %v1342
    %1578 = vst [vmem:[#allocation2] sm:$0xff] %v1577
    %s1579 = scalar_lea.vmem %s0, 24
    %v1580 = vld [vmem:[%s1579] sm:$0xff]
    %v1581 = vld [vmem:[%s1579 + $0x8] sm:$0xff]
    %v1582 = vld [vmem:[%s1579 + $0x10] sm:$0xff]
    %v1584 = vsel %vm464, %v1582, 0
    %1586 = vmatprep.subr.mxu0 0.0
    %1587 = vmatpush1.msra.mxu0 %v141
    %1588 = vmatprep.subr.mxu0 0.0
    %1589 = vmatpush1.msra.mxu0 %v140
    %1590 = vmatprep.subr.mxu0 0.0
    %1591 = vmatpush1.msra.mxu0 %v139
    %1592 = vmatprep.subr.mxu0 0.0
    %1593 = vmatpush1.msra.mxu0 %v138
    %1594 = vmatprep.subr.mxu0 0.0
    %1595 = vmatpush1.msra.mxu0 %v137
    %1596 = vmatprep.subr.mxu0 0.0
    %1597 = vmatpush1.msra.mxu0 %v136
    %1598 = vmatprep.subr.mxu0 0.0
    %1599 = vmatpush1.msra.mxu0 %v135
    %1600 = vmatprep.subr.mxu0 0.0
    %1601 = vmatpush1.msra.mxu0 %v134
    %1602 = vmatprep.subr.mxu0 0.0
    %1603 = vmatpush1.msra.mxu0 %v133
    %1604 = vmatprep.subr.mxu0 0.0
    %1605 = vmatpush1.msra.mxu0 %v132
    %1606 = vmatprep.subr.mxu0 0.0
    %1607 = vmatpush1.msra.mxu0 %v131
    %1608 = vmatprep.subr.mxu0 0.0
    %1609 = vmatpush1.msra.mxu0 %v130
    %1610 = vmatprep.subr.mxu0 0.0
    %1611 = vmatpush1.msra.mxu0 %v129
    %1612 = vmatprep.subr.mxu0 0.0
    %1613 = vmatpush1.msra.mxu0 %v128
    %1614 = vmatprep.subr.mxu0 0.0
    %1615 = vmatpush1.msra.mxu0 %v127
    %1616 = vmatprep.subr.mxu0 0.0
    %1617 = vmatpush1.msra.mxu0 %v126
    %1618 = vmatprep.subr.mxu0 0.0
    %1619 = vmatpush2.msra.mxu0 %v157
    %1620 = vmatprep.subr.mxu0 0.0
    %1621 = vmatpush2.msra.mxu0 %v156
    %1622 = vmatprep.subr.mxu0 0.0
    %1623 = vmatpush2.msra.mxu0 %v155
    %1624 = vmatprep.subr.mxu0 0.0
    %1625 = vmatpush2.msra.mxu0 %v154
    %1626 = vmatprep.subr.mxu0 0.0
    %1627 = vmatpush2.msra.mxu0 %v153
    %1628 = vmatprep.subr.mxu0 0.0
    %1629 = vmatpush2.msra.mxu0 %v152
    %1630 = vmatprep.subr.mxu0 0.0
    %1631 = vmatpush2.msra.mxu0 %v151
    %1632 = vmatprep.subr.mxu0 0.0
    %1633 = vmatpush2.msra.mxu0 %v150
    %1634 = vmatprep.subr.mxu0 0.0
    %1635 = vmatpush2.msra.mxu0 %v149
    %1636 = vmatprep.subr.mxu0 0.0
    %1637 = vmatpush2.msra.mxu0 %v148
    %1638 = vmatprep.subr.mxu0 0.0
    %1639 = vmatpush2.msra.mxu0 %v147
    %1640 = vmatprep.subr.mxu0 0.0
    %1641 = vmatpush2.msra.mxu0 %v146
    %1642 = vmatprep.subr.mxu0 0.0
    %1643 = vmatpush2.msra.mxu0 %v145
    %1644 = vmatprep.subr.mxu0 0.0
    %1645 = vmatpush2.msra.mxu0 %v144
    %1646 = vmatprep.subr.mxu0 0.0
    %1647 = vmatpush2.msra.mxu0 %v143
    %1648 = vmatprep.subr.mxu0 0.0
    %1649 = vmatpush2.msra.mxu0 %v142
    %1650 = vmatprep.mubr.f32.mxu0 %v1581
    %1651 = vmatmul.mubr.f32.gmra.mxu0 %v1580
    %v1652 = vpop.f32.mrf.mxu0
    %v1653 = vadd.f32 0.0, %v1652
    %v1654 = vpop.f32.mrf.mxu0
    %1655 = vdwg.mxu0
    %1656 = vmatprep.subr.mxu0 0.0
    %1657 = vmatpush1.msra.mxu0 0.0
    %1658 = vmatprep.subr.mxu0 0.0
    %1659 = vmatpush1.msra.mxu0 0.0
    %1660 = vmatprep.subr.mxu0 0.0
    %1661 = vmatpush1.msra.mxu0 0.0
    %1662 = vmatprep.subr.mxu0 0.0
    %1663 = vmatpush1.msra.mxu0 0.0
    %1664 = vmatprep.subr.mxu0 0.0
    %1665 = vmatpush1.msra.mxu0 0.0
    %1666 = vmatprep.subr.mxu0 0.0
    %1667 = vmatpush1.msra.mxu0 0.0
    %1668 = vmatprep.subr.mxu0 0.0
    %1669 = vmatpush1.msra.mxu0 0.0
    %1670 = vmatprep.subr.mxu0 0.0
    %1671 = vmatpush1.msra.mxu0 0.0
    %1672 = vmatprep.subr.mxu0 0.0
    %1673 = vmatpush1.msra.mxu0 0.0
    %1674 = vmatprep.subr.mxu0 0.0
    %1675 = vmatpush1.msra.mxu0 0.0
    %1676 = vmatprep.subr.mxu0 0.0
    %1677 = vmatpush1.msra.mxu0 0.0
    %1678 = vmatprep.subr.mxu0 0.0
    %1679 = vmatpush1.msra.mxu0 0.0
    %1680 = vmatprep.subr.mxu0 0.0
    %1681 = vmatpush1.msra.mxu0 0.0
    %1682 = vmatprep.subr.mxu0 0.0
    %1683 = vmatpush1.msra.mxu0 0.0
    %1684 = vmatprep.subr.mxu0 0.0
    %1685 = vmatpush1.msra.mxu0 0.0
    %1686 = vmatprep.subr.mxu0 0.0
    %1687 = vmatpush1.msra.mxu0 %v470
    %1688 = vmatprep.subr.mxu0 0.0
    %1689 = vmatpush2.msra.mxu0 0.0
    %1690 = vmatprep.subr.mxu0 0.0
    %1691 = vmatpush2.msra.mxu0 0.0
    %1692 = vmatprep.subr.mxu0 0.0
    %1693 = vmatpush2.msra.mxu0 0.0
    %1694 = vmatprep.subr.mxu0 0.0
    %1695 = vmatpush2.msra.mxu0 0.0
    %1696 = vmatprep.subr.mxu0 0.0
    %1697 = vmatpush2.msra.mxu0 0.0
    %1698 = vmatprep.subr.mxu0 0.0
    %1699 = vmatpush2.msra.mxu0 0.0
    %1700 = vmatprep.subr.mxu0 0.0
    %1701 = vmatpush2.msra.mxu0 0.0
    %1702 = vmatprep.subr.mxu0 0.0
    %1703 = vmatpush2.msra.mxu0 0.0
    %1704 = vmatprep.subr.mxu0 0.0
    %1705 = vmatpush2.msra.mxu0 0.0
    %1706 = vmatprep.subr.mxu0 0.0
    %1707 = vmatpush2.msra.mxu0 0.0
    %1708 = vmatprep.subr.mxu0 0.0
    %1709 = vmatpush2.msra.mxu0 0.0
    %1710 = vmatprep.subr.mxu0 0.0
    %1711 = vmatpush2.msra.mxu0 0.0
    %1712 = vmatprep.subr.mxu0 0.0
    %1713 = vmatpush2.msra.mxu0 0.0
    %1714 = vmatprep.subr.mxu0 0.0
    %1715 = vmatpush2.msra.mxu0 0.0
    %1716 = vmatprep.subr.mxu0 0.0
    %1717 = vmatpush2.msra.mxu0 0.0
    %1718 = vmatprep.subr.mxu0 0.0
    %1719 = vmatpush2.msra.mxu0 0.0
    %1720 = vmatprep.mubr.f32.mxu0 0.0
    %1721 = vmatmul.mubr.f32.gmra.mxu0 %v1584
    %v1722 = vpop.f32.mrf.mxu0
    %v1723 = vadd.f32 %v1653, %v1722
    %v1724 = vpop.f32.mrf.mxu0
    %1725 = vdwg.mxu0
    %1726 = vmatprep.subr.mxu0 0.0
    %1727 = vmatpush1.msra.mxu0 %v241
    %1728 = vmatprep.subr.mxu0 0.0
    %1729 = vmatpush1.msra.mxu0 %v240
    %1730 = vmatprep.subr.mxu0 0.0
    %1731 = vmatpush1.msra.mxu0 %v239
    %1732 = vmatprep.subr.mxu0 0.0
    %1733 = vmatpush1.msra.mxu0 %v238
    %1734 = vmatprep.subr.mxu0 0.0
    %1735 = vmatpush1.msra.mxu0 %v237
    %1736 = vmatprep.subr.mxu0 0.0
    %1737 = vmatpush1.msra.mxu0 %v236
    %1738 = vmatprep.subr.mxu0 0.0
    %1739 = vmatpush1.msra.mxu0 %v235
    %1740 = vmatprep.subr.mxu0 0.0
    %1741 = vmatpush1.msra.mxu0 %v234
    %1742 = vmatprep.subr.mxu0 0.0
    %1743 = vmatpush1.msra.mxu0 %v233
    %1744 = vmatprep.subr.mxu0 0.0
    %1745 = vmatpush1.msra.mxu0 %v232
    %1746 = vmatprep.subr.mxu0 0.0
    %1747 = vmatpush1.msra.mxu0 %v231
    %1748 = vmatprep.subr.mxu0 0.0
    %1749 = vmatpush1.msra.mxu0 %v230
    %1750 = vmatprep.subr.mxu0 0.0
    %1751 = vmatpush1.msra.mxu0 %v229
    %1752 = vmatprep.subr.mxu0 0.0
    %1753 = vmatpush1.msra.mxu0 %v228
    %1754 = vmatprep.subr.mxu0 0.0
    %1755 = vmatpush1.msra.mxu0 %v227
    %1756 = vmatprep.subr.mxu0 0.0
    %1757 = vmatpush1.msra.mxu0 %v226
    %1758 = vmatprep.subr.mxu0 0.0
    %1759 = vmatpush2.msra.mxu0 %v257
    %1760 = vmatprep.subr.mxu0 0.0
    %1761 = vmatpush2.msra.mxu0 %v256
    %1762 = vmatprep.subr.mxu0 0.0
    %1763 = vmatpush2.msra.mxu0 %v255
    %1764 = vmatprep.subr.mxu0 0.0
    %1765 = vmatpush2.msra.mxu0 %v254
    %1766 = vmatprep.subr.mxu0 0.0
    %1767 = vmatpush2.msra.mxu0 %v253
    %1768 = vmatprep.subr.mxu0 0.0
    %1769 = vmatpush2.msra.mxu0 %v252
    %1770 = vmatprep.subr.mxu0 0.0
    %1771 = vmatpush2.msra.mxu0 %v251
    %1772 = vmatprep.subr.mxu0 0.0
    %1773 = vmatpush2.msra.mxu0 %v250
    %1774 = vmatprep.subr.mxu0 0.0
    %1775 = vmatpush2.msra.mxu0 %v249
    %1776 = vmatprep.subr.mxu0 0.0
    %1777 = vmatpush2.msra.mxu0 %v248
    %1778 = vmatprep.subr.mxu0 0.0
    %1779 = vmatpush2.msra.mxu0 %v247
    %1780 = vmatprep.subr.mxu0 0.0
    %1781 = vmatpush2.msra.mxu0 %v246
    %1782 = vmatprep.subr.mxu0 0.0
    %1783 = vmatpush2.msra.mxu0 %v245
    %1784 = vmatprep.subr.mxu0 0.0
    %1785 = vmatpush2.msra.mxu0 %v244
    %1786 = vmatprep.subr.mxu0 0.0
    %1787 = vmatpush2.msra.mxu0 %v243
    %1788 = vmatprep.subr.mxu0 0.0
    %1789 = vmatpush2.msra.mxu0 %v242
    %1790 = vmatprep.mubr.f32.mxu0 %v1581
    %1791 = vmatmul.mubr.f32.gmra.mxu0 %v1580
    %v1792 = vpop.f32.mrf.mxu0
    %v1793 = vadd.f32 0.0, %v1792
    %v1794 = vpop.f32.mrf.mxu0
    %1795 = vdwg.mxu0
    %1796 = vmatprep.subr.mxu0 0.0
    %1797 = vmatpush1.msra.mxu0 0.0
    %1798 = vmatprep.subr.mxu0 0.0
    %1799 = vmatpush1.msra.mxu0 0.0
    %1800 = vmatprep.subr.mxu0 0.0
    %1801 = vmatpush1.msra.mxu0 0.0
    %1802 = vmatprep.subr.mxu0 0.0
    %1803 = vmatpush1.msra.mxu0 0.0
    %1804 = vmatprep.subr.mxu0 0.0
    %1805 = vmatpush1.msra.mxu0 0.0
    %1806 = vmatprep.subr.mxu0 0.0
    %1807 = vmatpush1.msra.mxu0 0.0
    %1808 = vmatprep.subr.mxu0 0.0
    %1809 = vmatpush1.msra.mxu0 0.0
    %1810 = vmatprep.subr.mxu0 0.0
    %1811 = vmatpush1.msra.mxu0 0.0
    %1812 = vmatprep.subr.mxu0 0.0
    %1813 = vmatpush1.msra.mxu0 0.0
    %1814 = vmatprep.subr.mxu0 0.0
    %1815 = vmatpush1.msra.mxu0 0.0
    %1816 = vmatprep.subr.mxu0 0.0
    %1817 = vmatpush1.msra.mxu0 0.0
    %1818 = vmatprep.subr.mxu0 0.0
    %1819 = vmatpush1.msra.mxu0 0.0
    %1820 = vmatprep.subr.mxu0 0.0
    %1821 = vmatpush1.msra.mxu0 0.0
    %1822 = vmatprep.subr.mxu0 0.0
    %1823 = vmatpush1.msra.mxu0 0.0
    %1824 = vmatprep.subr.mxu0 0.0
    %1825 = vmatpush1.msra.mxu0 0.0
    %1826 = vmatprep.subr.mxu0 0.0
    %1827 = vmatpush1.msra.mxu0 %v613
    %1828 = vmatprep.subr.mxu0 0.0
    %1829 = vmatpush2.msra.mxu0 0.0
    %1830 = vmatprep.subr.mxu0 0.0
    %1831 = vmatpush2.msra.mxu0 0.0
    %1832 = vmatprep.subr.mxu0 0.0
    %1833 = vmatpush2.msra.mxu0 0.0
    %1834 = vmatprep.subr.mxu0 0.0
    %1835 = vmatpush2.msra.mxu0 0.0
    %1836 = vmatprep.subr.mxu0 0.0
    %1837 = vmatpush2.msra.mxu0 0.0
    %1838 = vmatprep.subr.mxu0 0.0
    %1839 = vmatpush2.msra.mxu0 0.0
    %1840 = vmatprep.subr.mxu0 0.0
    %1841 = vmatpush2.msra.mxu0 0.0
    %1842 = vmatprep.subr.mxu0 0.0
    %1843 = vmatpush2.msra.mxu0 0.0
    %1844 = vmatprep.subr.mxu0 0.0
    %1845 = vmatpush2.msra.mxu0 0.0
    %1846 = vmatprep.subr.mxu0 0.0
    %1847 = vmatpush2.msra.mxu0 0.0
    %1848 = vmatprep.subr.mxu0 0.0
    %1849 = vmatpush2.msra.mxu0 0.0
    %1850 = vmatprep.subr.mxu0 0.0
    %1851 = vmatpush2.msra.mxu0 0.0
    %1852 = vmatprep.subr.mxu0 0.0
    %1853 = vmatpush2.msra.mxu0 0.0
    %1854 = vmatprep.subr.mxu0 0.0
    %1855 = vmatpush2.msra.mxu0 0.0
    %1856 = vmatprep.subr.mxu0 0.0
    %1857 = vmatpush2.msra.mxu0 0.0
    %1858 = vmatprep.subr.mxu0 0.0
    %1859 = vmatpush2.msra.mxu0 0.0
    %1860 = vmatprep.mubr.f32.mxu0 0.0
    %1861 = vmatmul.mubr.f32.gmra.mxu0 %v1584
    %v1862 = vpop.f32.mrf.mxu0
    %v1863 = vadd.f32 %v1793, %v1862
    %v1864 = vpop.f32.mrf.mxu0
    %1865 = vdwg.mxu0
    %1866 = vmatprep.subr.mxu0 0.0
    %1867 = vmatpush1.msra.mxu0 0.0
    %1868 = vmatprep.subr.mxu0 0.0
    %1869 = vmatpush1.msra.mxu0 0.0
    %1870 = vmatprep.subr.mxu0 0.0
    %1871 = vmatpush1.msra.mxu0 0.0
    %1872 = vmatprep.subr.mxu0 0.0
    %1873 = vmatpush1.msra.mxu0 0.0
    %1874 = vmatprep.subr.mxu0 0.0
    %1875 = vmatpush1.msra.mxu0 0.0
    %1876 = vmatprep.subr.mxu0 0.0
    %1877 = vmatpush1.msra.mxu0 0.0
    %1878 = vmatprep.subr.mxu0 0.0
    %1879 = vmatpush1.msra.mxu0 0.0
    %1880 = vmatprep.subr.mxu0 0.0
    %1881 = vmatpush1.msra.mxu0 0.0
    %1882 = vmatprep.subr.mxu0 0.0
    %1883 = vmatpush1.msra.mxu0 0.0
    %1884 = vmatprep.subr.mxu0 0.0
    %1885 = vmatpush1.msra.mxu0 0.0
    %1886 = vmatprep.subr.mxu0 0.0
    %1887 = vmatpush1.msra.mxu0 0.0
    %1888 = vmatprep.subr.mxu0 0.0
    %1889 = vmatpush1.msra.mxu0 0.0
    %1890 = vmatprep.subr.mxu0 0.0
    %1891 = vmatpush1.msra.mxu0 0.0
    %1892 = vmatprep.subr.mxu0 0.0
    %1893 = vmatpush1.msra.mxu0 0.0
    %1894 = vmatprep.subr.mxu0 0.0
    %1895 = vmatpush1.msra.mxu0 0.0
    %1896 = vmatprep.subr.mxu0 0.0
    %1897 = vmatpush1.msra.mxu0 %v1863
    %1898 = vmatprep.subr.mxu0 0.0
    %1899 = vmatpush2.msra.mxu0 0.0
    %1900 = vmatprep.subr.mxu0 0.0
    %1901 = vmatpush2.msra.mxu0 0.0
    %1902 = vmatprep.subr.mxu0 0.0
    %1903 = vmatpush2.msra.mxu0 0.0
    %1904 = vmatprep.subr.mxu0 0.0
    %1905 = vmatpush2.msra.mxu0 0.0
    %1906 = vmatprep.subr.mxu0 0.0
    %1907 = vmatpush2.msra.mxu0 0.0
    %1908 = vmatprep.subr.mxu0 0.0
    %1909 = vmatpush2.msra.mxu0 0.0
    %1910 = vmatprep.subr.mxu0 0.0
    %1911 = vmatpush2.msra.mxu0 0.0
    %1912 = vmatprep.subr.mxu0 0.0
    %1913 = vmatpush2.msra.mxu0 0.0
    %1914 = vmatprep.subr.mxu0 0.0
    %1915 = vmatpush2.msra.mxu0 0.0
    %1916 = vmatprep.subr.mxu0 0.0
    %1917 = vmatpush2.msra.mxu0 0.0
    %1918 = vmatprep.subr.mxu0 0.0
    %1919 = vmatpush2.msra.mxu0 0.0
    %1920 = vmatprep.subr.mxu0 0.0
    %1921 = vmatpush2.msra.mxu0 0.0
    %1922 = vmatprep.subr.mxu0 0.0
    %1923 = vmatpush2.msra.mxu0 0.0
    %1924 = vmatprep.subr.mxu0 0.0
    %1925 = vmatpush2.msra.mxu0 0.0
    %1926 = vmatprep.subr.mxu0 0.0
    %1927 = vmatpush2.msra.mxu0 0.0
    %1928 = vmatprep.subr.mxu0 0.0
    %1929 = vmatpush2.msra.mxu0 0.0
    %1930 = vmatprep.mubr.f32.mxu0 0.0
    %1931 = vmatmul.mubr.f32.gmra.mxu0 %v757
    %v1932 = vpop.f32.mrf.mxu0
    %v1933 = vadd.f32 0.0, %v1932
    %v1934 = vpop.f32.mrf.mxu0
    %1935 = vdwg.mxu0
    %1936 = vmatprep.subr.mxu0 0.0
    %1937 = vmatpush1.msra.mxu0 0.0
    %1938 = vmatprep.subr.mxu0 0.0
    %1939 = vmatpush1.msra.mxu0 0.0
    %1940 = vmatprep.subr.mxu0 0.0
    %1941 = vmatpush1.msra.mxu0 0.0
    %1942 = vmatprep.subr.mxu0 0.0
    %1943 = vmatpush1.msra.mxu0 0.0
    %1944 = vmatprep.subr.mxu0 0.0
    %1945 = vmatpush1.msra.mxu0 0.0
    %1946 = vmatprep.subr.mxu0 0.0
    %1947 = vmatpush1.msra.mxu0 0.0
    %1948 = vmatprep.subr.mxu0 0.0
    %1949 = vmatpush1.msra.mxu0 0.0
    %1950 = vmatprep.subr.mxu0 0.0
    %1951 = vmatpush1.msra.mxu0 0.0
    %1952 = vmatprep.subr.mxu0 0.0
    %1953 = vmatpush1.msra.mxu0 0.0
    %1954 = vmatprep.subr.mxu0 0.0
    %1955 = vmatpush1.msra.mxu0 0.0
    %1956 = vmatprep.subr.mxu0 0.0
    %1957 = vmatpush1.msra.mxu0 0.0
    %1958 = vmatprep.subr.mxu0 0.0
    %1959 = vmatpush1.msra.mxu0 0.0
    %1960 = vmatprep.subr.mxu0 0.0
    %1961 = vmatpush1.msra.mxu0 0.0
    %1962 = vmatprep.subr.mxu0 0.0
    %1963 = vmatpush1.msra.mxu0 0.0
    %1964 = vmatprep.subr.mxu0 0.0
    %1965 = vmatpush1.msra.mxu0 0.0
    %1966 = vmatprep.subr.mxu0 0.0
    %1967 = vmatpush1.msra.mxu0 %v1723
    %1968 = vmatprep.subr.mxu0 0.0
    %1969 = vmatpush2.msra.mxu0 0.0
    %1970 = vmatprep.subr.mxu0 0.0
    %1971 = vmatpush2.msra.mxu0 0.0
    %1972 = vmatprep.subr.mxu0 0.0
    %1973 = vmatpush2.msra.mxu0 0.0
    %1974 = vmatprep.subr.mxu0 0.0
    %1975 = vmatpush2.msra.mxu0 0.0
    %1976 = vmatprep.subr.mxu0 0.0
    %1977 = vmatpush2.msra.mxu0 0.0
    %1978 = vmatprep.subr.mxu0 0.0
    %1979 = vmatpush2.msra.mxu0 0.0
    %1980 = vmatprep.subr.mxu0 0.0
    %1981 = vmatpush2.msra.mxu0 0.0
    %1982 = vmatprep.subr.mxu0 0.0
    %1983 = vmatpush2.msra.mxu0 0.0
    %1984 = vmatprep.subr.mxu0 0.0
    %1985 = vmatpush2.msra.mxu0 0.0
    %1986 = vmatprep.subr.mxu0 0.0
    %1987 = vmatpush2.msra.mxu0 0.0
    %1988 = vmatprep.subr.mxu0 0.0
    %1989 = vmatpush2.msra.mxu0 0.0
    %1990 = vmatprep.subr.mxu0 0.0
    %1991 = vmatpush2.msra.mxu0 0.0
    %1992 = vmatprep.subr.mxu0 0.0
    %1993 = vmatpush2.msra.mxu0 0.0
    %1994 = vmatprep.subr.mxu0 0.0
    %1995 = vmatpush2.msra.mxu0 0.0
    %1996 = vmatprep.subr.mxu0 0.0
    %1997 = vmatpush2.msra.mxu0 0.0
    %1998 = vmatprep.subr.mxu0 0.0
    %1999 = vmatpush2.msra.mxu0 0.0
    %2000 = vmatprep.mubr.f32.mxu0 0.0
    %2001 = vmatmul.mubr.f32.gmra.mxu0 %v830
    %v2002 = vpop.f32.mrf.mxu0
    %v2003 = vadd.f32 %v1933, %v2002
    %v2004 = vpop.f32.mrf.mxu0
    %2005 = vdwg.mxu0
    %2006 = vmatprep.subr.mxu0 0.0
    %2007 = vmatpush1.msra.mxu0 %v341
    %2008 = vmatprep.subr.mxu0 0.0
    %2009 = vmatpush1.msra.mxu0 %v340
    %2010 = vmatprep.subr.mxu0 0.0
    %2011 = vmatpush1.msra.mxu0 %v339
    %2012 = vmatprep.subr.mxu0 0.0
    %2013 = vmatpush1.msra.mxu0 %v338
    %2014 = vmatprep.subr.mxu0 0.0
    %2015 = vmatpush1.msra.mxu0 %v337
    %2016 = vmatprep.subr.mxu0 0.0
    %2017 = vmatpush1.msra.mxu0 %v336
    %2018 = vmatprep.subr.mxu0 0.0
    %2019 = vmatpush1.msra.mxu0 %v335
    %2020 = vmatprep.subr.mxu0 0.0
    %2021 = vmatpush1.msra.mxu0 %v334
    %2022 = vmatprep.subr.mxu0 0.0
    %2023 = vmatpush1.msra.mxu0 %v333
    %2024 = vmatprep.subr.mxu0 0.0
    %2025 = vmatpush1.msra.mxu0 %v332
    %2026 = vmatprep.subr.mxu0 0.0
    %2027 = vmatpush1.msra.mxu0 %v331
    %2028 = vmatprep.subr.mxu0 0.0
    %2029 = vmatpush1.msra.mxu0 %v330
    %2030 = vmatprep.subr.mxu0 0.0
    %2031 = vmatpush1.msra.mxu0 %v329
    %2032 = vmatprep.subr.mxu0 0.0
    %2033 = vmatpush1.msra.mxu0 %v328
    %2034 = vmatprep.subr.mxu0 0.0
    %2035 = vmatpush1.msra.mxu0 %v327
    %2036 = vmatprep.subr.mxu0 0.0
    %2037 = vmatpush1.msra.mxu0 %v326
    %2038 = vmatprep.subr.mxu0 0.0
    %2039 = vmatpush2.msra.mxu0 %v357
    %2040 = vmatprep.subr.mxu0 0.0
    %2041 = vmatpush2.msra.mxu0 %v356
    %2042 = vmatprep.subr.mxu0 0.0
    %2043 = vmatpush2.msra.mxu0 %v355
    %2044 = vmatprep.subr.mxu0 0.0
    %2045 = vmatpush2.msra.mxu0 %v354
    %2046 = vmatprep.subr.mxu0 0.0
    %2047 = vmatpush2.msra.mxu0 %v353
    %2048 = vmatprep.subr.mxu0 0.0
    %2049 = vmatpush2.msra.mxu0 %v352
    %2050 = vmatprep.subr.mxu0 0.0
    %2051 = vmatpush2.msra.mxu0 %v351
    %2052 = vmatprep.subr.mxu0 0.0
    %2053 = vmatpush2.msra.mxu0 %v350
    %2054 = vmatprep.subr.mxu0 0.0
    %2055 = vmatpush2.msra.mxu0 %v349
    %2056 = vmatprep.subr.mxu0 0.0
    %2057 = vmatpush2.msra.mxu0 %v348
    %2058 = vmatprep.subr.mxu0 0.0
    %2059 = vmatpush2.msra.mxu0 %v347
    %2060 = vmatprep.subr.mxu0 0.0
    %2061 = vmatpush2.msra.mxu0 %v346
    %2062 = vmatprep.subr.mxu0 0.0
    %2063 = vmatpush2.msra.mxu0 %v345
    %2064 = vmatprep.subr.mxu0 0.0
    %2065 = vmatpush2.msra.mxu0 %v344
    %2066 = vmatprep.subr.mxu0 0.0
    %2067 = vmatpush2.msra.mxu0 %v343
    %2068 = vmatprep.subr.mxu0 0.0
    %2069 = vmatpush2.msra.mxu0 %v342
    %2070 = vmatprep.mubr.f32.mxu0 %v1581
    %2071 = vmatmul.mubr.f32.gmra.mxu0 %v1580
    %v2072 = vpop.f32.mrf.mxu0
    %v2073 = vadd.f32 0.0, %v2072
    %v2074 = vpop.f32.mrf.mxu0
    %2075 = vdwg.mxu0
    %2076 = vmatprep.subr.mxu0 0.0
    %2077 = vmatpush1.msra.mxu0 0.0
    %2078 = vmatprep.subr.mxu0 0.0
    %2079 = vmatpush1.msra.mxu0 0.0
    %2080 = vmatprep.subr.mxu0 0.0
    %2081 = vmatpush1.msra.mxu0 0.0
    %2082 = vmatprep.subr.mxu0 0.0
    %2083 = vmatpush1.msra.mxu0 0.0
    %2084 = vmatprep.subr.mxu0 0.0
    %2085 = vmatpush1.msra.mxu0 0.0
    %2086 = vmatprep.subr.mxu0 0.0
    %2087 = vmatpush1.msra.mxu0 0.0
    %2088 = vmatprep.subr.mxu0 0.0
    %2089 = vmatpush1.msra.mxu0 0.0
    %2090 = vmatprep.subr.mxu0 0.0
    %2091 = vmatpush1.msra.mxu0 0.0
    %2092 = vmatprep.subr.mxu0 0.0
    %2093 = vmatpush1.msra.mxu0 0.0
    %2094 = vmatprep.subr.mxu0 0.0
    %2095 = vmatpush1.msra.mxu0 0.0
    %2096 = vmatprep.subr.mxu0 0.0
    %2097 = vmatpush1.msra.mxu0 0.0
    %2098 = vmatprep.subr.mxu0 0.0
    %2099 = vmatpush1.msra.mxu0 0.0
    %2100 = vmatprep.subr.mxu0 0.0
    %2101 = vmatpush1.msra.mxu0 0.0
    %2102 = vmatprep.subr.mxu0 0.0
    %2103 = vmatpush1.msra.mxu0 0.0
    %2104 = vmatprep.subr.mxu0 0.0
    %2105 = vmatpush1.msra.mxu0 0.0
    %2106 = vmatprep.subr.mxu0 0.0
    %2107 = vmatpush1.msra.mxu0 %v903
    %2108 = vmatprep.subr.mxu0 0.0
    %2109 = vmatpush2.msra.mxu0 0.0
    %2110 = vmatprep.subr.mxu0 0.0
    %2111 = vmatpush2.msra.mxu0 0.0
    %2112 = vmatprep.subr.mxu0 0.0
    %2113 = vmatpush2.msra.mxu0 0.0
    %2114 = vmatprep.subr.mxu0 0.0
    %2115 = vmatpush2.msra.mxu0 0.0
    %2116 = vmatprep.subr.mxu0 0.0
    %2117 = vmatpush2.msra.mxu0 0.0
    %2118 = vmatprep.subr.mxu0 0.0
    %2119 = vmatpush2.msra.mxu0 0.0
    %2120 = vmatprep.subr.mxu0 0.0
    %2121 = vmatpush2.msra.mxu0 0.0
    %2122 = vmatprep.subr.mxu0 0.0
    %2123 = vmatpush2.msra.mxu0 0.0
    %2124 = vmatprep.subr.mxu0 0.0
    %2125 = vmatpush2.msra.mxu0 0.0
    %2126 = vmatprep.subr.mxu0 0.0
    %2127 = vmatpush2.msra.mxu0 0.0
    %2128 = vmatprep.subr.mxu0 0.0
    %2129 = vmatpush2.msra.mxu0 0.0
    %2130 = vmatprep.subr.mxu0 0.0
    %2131 = vmatpush2.msra.mxu0 0.0
    %2132 = vmatprep.subr.mxu0 0.0
    %2133 = vmatpush2.msra.mxu0 0.0
    %2134 = vmatprep.subr.mxu0 0.0
    %2135 = vmatpush2.msra.mxu0 0.0
    %2136 = vmatprep.subr.mxu0 0.0
    %2137 = vmatpush2.msra.mxu0 0.0
    %2138 = vmatprep.subr.mxu0 0.0
    %2139 = vmatpush2.msra.mxu0 0.0
    %2140 = vmatprep.mubr.f32.mxu0 0.0
    %2141 = vmatmul.mubr.f32.gmra.mxu0 %v1584
    %v2142 = vpop.f32.mrf.mxu0
    %v2143 = vadd.f32 %v2073, %v2142
    %v2144 = vpop.f32.mrf.mxu0
    %2145 = vdwg.mxu0
    %2146 = vmatprep.subr.mxu0 0.0
    %2147 = vmatpush1.msra.mxu0 0.0
    %2148 = vmatprep.subr.mxu0 0.0
    %2149 = vmatpush1.msra.mxu0 0.0
    %2150 = vmatprep.subr.mxu0 0.0
    %2151 = vmatpush1.msra.mxu0 0.0
    %2152 = vmatprep.subr.mxu0 0.0
    %2153 = vmatpush1.msra.mxu0 0.0
    %2154 = vmatprep.subr.mxu0 0.0
    %2155 = vmatpush1.msra.mxu0 0.0
    %2156 = vmatprep.subr.mxu0 0.0
    %2157 = vmatpush1.msra.mxu0 0.0
    %2158 = vmatprep.subr.mxu0 0.0
    %2159 = vmatpush1.msra.mxu0 0.0
    %2160 = vmatprep.subr.mxu0 0.0
    %2161 = vmatpush1.msra.mxu0 0.0
    %2162 = vmatprep.subr.mxu0 0.0
    %2163 = vmatpush1.msra.mxu0 0.0
    %2164 = vmatprep.subr.mxu0 0.0
    %2165 = vmatpush1.msra.mxu0 0.0
    %2166 = vmatprep.subr.mxu0 0.0
    %2167 = vmatpush1.msra.mxu0 0.0
    %2168 = vmatprep.subr.mxu0 0.0
    %2169 = vmatpush1.msra.mxu0 0.0
    %2170 = vmatprep.subr.mxu0 0.0
    %2171 = vmatpush1.msra.mxu0 0.0
    %2172 = vmatprep.subr.mxu0 0.0
    %2173 = vmatpush1.msra.mxu0 0.0
    %2174 = vmatprep.subr.mxu0 0.0
    %2175 = vmatpush1.msra.mxu0 0.0
    %2176 = vmatprep.subr.mxu0 0.0
    %2177 = vmatpush1.msra.mxu0 %v2143
    %2178 = vmatprep.subr.mxu0 0.0
    %2179 = vmatpush2.msra.mxu0 0.0
    %2180 = vmatprep.subr.mxu0 0.0
    %2181 = vmatpush2.msra.mxu0 0.0
    %2182 = vmatprep.subr.mxu0 0.0
    %2183 = vmatpush2.msra.mxu0 0.0
    %2184 = vmatprep.subr.mxu0 0.0
    %2185 = vmatpush2.msra.mxu0 0.0
    %2186 = vmatprep.subr.mxu0 0.0
    %2187 = vmatpush2.msra.mxu0 0.0
    %2188 = vmatprep.subr.mxu0 0.0
    %2189 = vmatpush2.msra.mxu0 0.0
    %2190 = vmatprep.subr.mxu0 0.0
    %2191 = vmatpush2.msra.mxu0 0.0
    %2192 = vmatprep.subr.mxu0 0.0
    %2193 = vmatpush2.msra.mxu0 0.0
    %2194 = vmatprep.subr.mxu0 0.0
    %2195 = vmatpush2.msra.mxu0 0.0
    %2196 = vmatprep.subr.mxu0 0.0
    %2197 = vmatpush2.msra.mxu0 0.0
    %2198 = vmatprep.subr.mxu0 0.0
    %2199 = vmatpush2.msra.mxu0 0.0
    %2200 = vmatprep.subr.mxu0 0.0
    %2201 = vmatpush2.msra.mxu0 0.0
    %2202 = vmatprep.subr.mxu0 0.0
    %2203 = vmatpush2.msra.mxu0 0.0
    %2204 = vmatprep.subr.mxu0 0.0
    %2205 = vmatpush2.msra.mxu0 0.0
    %2206 = vmatprep.subr.mxu0 0.0
    %2207 = vmatpush2.msra.mxu0 0.0
    %2208 = vmatprep.subr.mxu0 0.0
    %2209 = vmatpush2.msra.mxu0 0.0
    %2210 = vmatprep.mubr.f32.mxu0 0.0
    %2211 = vmatmul.mubr.f32.gmra.mxu0 %v1046
    %v2212 = vpop.f32.mrf.mxu0
    %v2213 = vadd.f32 0.0, %v2212
    %v2214 = vpop.f32.mrf.mxu0
    %2215 = vdwg.mxu0
    %v2216 = vadd.f32 %v2003, %v2213
    %2217 = vmatprep.subr.mxu0 0.0
    %2218 = vmatpush1.msra.mxu0 %v441
    %2219 = vmatprep.subr.mxu0 0.0
    %2220 = vmatpush1.msra.mxu0 %v440
    %2221 = vmatprep.subr.mxu0 0.0
    %2222 = vmatpush1.msra.mxu0 %v439
    %2223 = vmatprep.subr.mxu0 0.0
    %2224 = vmatpush1.msra.mxu0 %v438
    %2225 = vmatprep.subr.mxu0 0.0
    %2226 = vmatpush1.msra.mxu0 %v437
    %2227 = vmatprep.subr.mxu0 0.0
    %2228 = vmatpush1.msra.mxu0 %v436
    %2229 = vmatprep.subr.mxu0 0.0
    %2230 = vmatpush1.msra.mxu0 %v435
    %2231 = vmatprep.subr.mxu0 0.0
    %2232 = vmatpush1.msra.mxu0 %v434
    %2233 = vmatprep.subr.mxu0 0.0
    %2234 = vmatpush1.msra.mxu0 %v433
    %2235 = vmatprep.subr.mxu0 0.0
    %2236 = vmatpush1.msra.mxu0 %v432
    %2237 = vmatprep.subr.mxu0 0.0
    %2238 = vmatpush1.msra.mxu0 %v431
    %2239 = vmatprep.subr.mxu0 0.0
    %2240 = vmatpush1.msra.mxu0 %v430
    %2241 = vmatprep.subr.mxu0 0.0
    %2242 = vmatpush1.msra.mxu0 %v429
    %2243 = vmatprep.subr.mxu0 0.0
    %2244 = vmatpush1.msra.mxu0 %v428
    %2245 = vmatprep.subr.mxu0 0.0
    %2246 = vmatpush1.msra.mxu0 %v427
    %2247 = vmatprep.subr.mxu0 0.0
    %2248 = vmatpush1.msra.mxu0 %v426
    %2249 = vmatprep.subr.mxu0 0.0
    %2250 = vmatpush2.msra.mxu0 %v457
    %2251 = vmatprep.subr.mxu0 0.0
    %2252 = vmatpush2.msra.mxu0 %v456
    %2253 = vmatprep.subr.mxu0 0.0
    %2254 = vmatpush2.msra.mxu0 %v455
    %2255 = vmatprep.subr.mxu0 0.0
    %2256 = vmatpush2.msra.mxu0 %v454
    %2257 = vmatprep.subr.mxu0 0.0
    %2258 = vmatpush2.msra.mxu0 %v453
    %2259 = vmatprep.subr.mxu0 0.0
    %2260 = vmatpush2.msra.mxu0 %v452
    %2261 = vmatprep.subr.mxu0 0.0
    %2262 = vmatpush2.msra.mxu0 %v451
    %2263 = vmatprep.subr.mxu0 0.0
    %2264 = vmatpush2.msra.mxu0 %v450
    %2265 = vmatprep.subr.mxu0 0.0
    %2266 = vmatpush2.msra.mxu0 %v449
    %2267 = vmatprep.subr.mxu0 0.0
    %2268 = vmatpush2.msra.mxu0 %v448
    %2269 = vmatprep.subr.mxu0 0.0
    %2270 = vmatpush2.msra.mxu0 %v447
    %2271 = vmatprep.subr.mxu0 0.0
    %2272 = vmatpush2.msra.mxu0 %v446
    %2273 = vmatprep.subr.mxu0 0.0
    %2274 = vmatpush2.msra.mxu0 %v445
    %2275 = vmatprep.subr.mxu0 0.0
    %2276 = vmatpush2.msra.mxu0 %v444
    %2277 = vmatprep.subr.mxu0 0.0
    %2278 = vmatpush2.msra.mxu0 %v443
    %2279 = vmatprep.subr.mxu0 0.0
    %2280 = vmatpush2.msra.mxu0 %v442
    %2281 = vmatprep.mubr.f32.mxu0 %v1581
    %2282 = vmatmul.mubr.f32.gmra.mxu0 %v1580
    %v2283 = vpop.f32.mrf.mxu0
    %v2284 = vadd.f32 0.0, %v2283
    %v2285 = vpop.f32.mrf.mxu0
    %2286 = vdwg.mxu0
    %2287 = vmatprep.subr.mxu0 0.0
    %2288 = vmatpush1.msra.mxu0 0.0
    %2289 = vmatprep.subr.mxu0 0.0
    %2290 = vmatpush1.msra.mxu0 0.0
    %2291 = vmatprep.subr.mxu0 0.0
    %2292 = vmatpush1.msra.mxu0 0.0
    %2293 = vmatprep.subr.mxu0 0.0
    %2294 = vmatpush1.msra.mxu0 0.0
    %2295 = vmatprep.subr.mxu0 0.0
    %2296 = vmatpush1.msra.mxu0 0.0
    %2297 = vmatprep.subr.mxu0 0.0
    %2298 = vmatpush1.msra.mxu0 0.0
    %2299 = vmatprep.subr.mxu0 0.0
    %2300 = vmatpush1.msra.mxu0 0.0
    %2301 = vmatprep.subr.mxu0 0.0
    %2302 = vmatpush1.msra.mxu0 0.0
    %2303 = vmatprep.subr.mxu0 0.0
    %2304 = vmatpush1.msra.mxu0 0.0
    %2305 = vmatprep.subr.mxu0 0.0
    %2306 = vmatpush1.msra.mxu0 0.0
    %2307 = vmatprep.subr.mxu0 0.0
    %2308 = vmatpush1.msra.mxu0 0.0
    %2309 = vmatprep.subr.mxu0 0.0
    %2310 = vmatpush1.msra.mxu0 0.0
    %2311 = vmatprep.subr.mxu0 0.0
    %2312 = vmatpush1.msra.mxu0 0.0
    %2313 = vmatprep.subr.mxu0 0.0
    %2314 = vmatpush1.msra.mxu0 0.0
    %2315 = vmatprep.subr.mxu0 0.0
    %2316 = vmatpush1.msra.mxu0 0.0
    %2317 = vmatprep.subr.mxu0 0.0
    %2318 = vmatpush1.msra.mxu0 %v1120
    %2319 = vmatprep.subr.mxu0 0.0
    %2320 = vmatpush2.msra.mxu0 0.0
    %2321 = vmatprep.subr.mxu0 0.0
    %2322 = vmatpush2.msra.mxu0 0.0
    %2323 = vmatprep.subr.mxu0 0.0
    %2324 = vmatpush2.msra.mxu0 0.0
    %2325 = vmatprep.subr.mxu0 0.0
    %2326 = vmatpush2.msra.mxu0 0.0
    %2327 = vmatprep.subr.mxu0 0.0
    %2328 = vmatpush2.msra.mxu0 0.0
    %2329 = vmatprep.subr.mxu0 0.0
    %2330 = vmatpush2.msra.mxu0 0.0
    %2331 = vmatprep.subr.mxu0 0.0
    %2332 = vmatpush2.msra.mxu0 0.0
    %2333 = vmatprep.subr.mxu0 0.0
    %2334 = vmatpush2.msra.mxu0 0.0
    %2335 = vmatprep.subr.mxu0 0.0
    %2336 = vmatpush2.msra.mxu0 0.0
    %2337 = vmatprep.subr.mxu0 0.0
    %2338 = vmatpush2.msra.mxu0 0.0
    %2339 = vmatprep.subr.mxu0 0.0
    %2340 = vmatpush2.msra.mxu0 0.0
    %2341 = vmatprep.subr.mxu0 0.0
    %2342 = vmatpush2.msra.mxu0 0.0
    %2343 = vmatprep.subr.mxu0 0.0
    %2344 = vmatpush2.msra.mxu0 0.0
    %2345 = vmatprep.subr.mxu0 0.0
    %2346 = vmatpush2.msra.mxu0 0.0
    %2347 = vmatprep.subr.mxu0 0.0
    %2348 = vmatpush2.msra.mxu0 0.0
    %2349 = vmatprep.subr.mxu0 0.0
    %2350 = vmatpush2.msra.mxu0 0.0
    %2351 = vmatprep.mubr.f32.mxu0 0.0
    %2352 = vmatmul.mubr.f32.gmra.mxu0 %v1584
    %v2353 = vpop.f32.mrf.mxu0
    %v2354 = vadd.f32 %v2284, %v2353
    %v2355 = vpop.f32.mrf.mxu0
    %2356 = vdwg.mxu0
    %2357 = vmatprep.subr.mxu0 0.0
    %2358 = vmatpush1.msra.mxu0 0.0
    %2359 = vmatprep.subr.mxu0 0.0
    %2360 = vmatpush1.msra.mxu0 0.0
    %2361 = vmatprep.subr.mxu0 0.0
    %2362 = vmatpush1.msra.mxu0 0.0
    %2363 = vmatprep.subr.mxu0 0.0
    %2364 = vmatpush1.msra.mxu0 0.0
    %2365 = vmatprep.subr.mxu0 0.0
    %2366 = vmatpush1.msra.mxu0 0.0
    %2367 = vmatprep.subr.mxu0 0.0
    %2368 = vmatpush1.msra.mxu0 0.0
    %2369 = vmatprep.subr.mxu0 0.0
    %2370 = vmatpush1.msra.mxu0 0.0
    %2371 = vmatprep.subr.mxu0 0.0
    %2372 = vmatpush1.msra.mxu0 0.0
    %2373 = vmatprep.subr.mxu0 0.0
    %2374 = vmatpush1.msra.mxu0 0.0
    %2375 = vmatprep.subr.mxu0 0.0
    %2376 = vmatpush1.msra.mxu0 0.0
    %2377 = vmatprep.subr.mxu0 0.0
    %2378 = vmatpush1.msra.mxu0 0.0
    %2379 = vmatprep.subr.mxu0 0.0
    %2380 = vmatpush1.msra.mxu0 0.0
    %2381 = vmatprep.subr.mxu0 0.0
    %2382 = vmatpush1.msra.mxu0 0.0
    %2383 = vmatprep.subr.mxu0 0.0
    %2384 = vmatpush1.msra.mxu0 0.0
    %2385 = vmatprep.subr.mxu0 0.0
    %2386 = vmatpush1.msra.mxu0 0.0
    %2387 = vmatprep.subr.mxu0 0.0
    %2388 = vmatpush1.msra.mxu0 %v2354
    %2389 = vmatprep.subr.mxu0 0.0
    %2390 = vmatpush2.msra.mxu0 0.0
    %2391 = vmatprep.subr.mxu0 0.0
    %2392 = vmatpush2.msra.mxu0 0.0
    %2393 = vmatprep.subr.mxu0 0.0
    %2394 = vmatpush2.msra.mxu0 0.0
    %2395 = vmatprep.subr.mxu0 0.0
    %2396 = vmatpush2.msra.mxu0 0.0
    %2397 = vmatprep.subr.mxu0 0.0
    %2398 = vmatpush2.msra.mxu0 0.0
    %2399 = vmatprep.subr.mxu0 0.0
    %2400 = vmatpush2.msra.mxu0 0.0
    %2401 = vmatprep.subr.mxu0 0.0
    %2402 = vmatpush2.msra.mxu0 0.0
    %2403 = vmatprep.subr.mxu0 0.0
    %2404 = vmatpush2.msra.mxu0 0.0
    %2405 = vmatprep.subr.mxu0 0.0
    %2406 = vmatpush2.msra.mxu0 0.0
    %2407 = vmatprep.subr.mxu0 0.0
    %2408 = vmatpush2.msra.mxu0 0.0
    %2409 = vmatprep.subr.mxu0 0.0
    %2410 = vmatpush2.msra.mxu0 0.0
    %2411 = vmatprep.subr.mxu0 0.0
    %2412 = vmatpush2.msra.mxu0 0.0
    %2413 = vmatprep.subr.mxu0 0.0
    %2414 = vmatpush2.msra.mxu0 0.0
    %2415 = vmatprep.subr.mxu0 0.0
    %2416 = vmatpush2.msra.mxu0 0.0
    %2417 = vmatprep.subr.mxu0 0.0
    %2418 = vmatpush2.msra.mxu0 0.0
    %2419 = vmatprep.subr.mxu0 0.0
    %2420 = vmatpush2.msra.mxu0 0.0
    %2421 = vmatprep.mubr.f32.mxu0 0.0
    %2422 = vmatmul.mubr.f32.gmra.mxu0 %v1263
    %v2423 = vpop.f32.mrf.mxu0
    %v2424 = vadd.f32 0.0, %v2423
    %v2425 = vpop.f32.mrf.mxu0
    %2426 = vdwg.mxu0
    %v2427 = vadd.f32 %v2216, %v2424
    %v2428 = vadd.f32 %v2427, %v1339
    %v2429 = vmax.f32 %v2428, 0.0
    %2430 = vmatprep.subr.mxu0 0.0
    %2431 = vmatpush1.msra.mxu0 0.0
    %2432 = vmatprep.subr.mxu0 0.0
    %2433 = vmatpush1.msra.mxu0 0.0
    %2434 = vmatprep.subr.mxu0 0.0
    %2435 = vmatpush1.msra.mxu0 0.0
    %2436 = vmatprep.subr.mxu0 0.0
    %2437 = vmatpush1.msra.mxu0 0.0
    %2438 = vmatprep.subr.mxu0 0.0
    %2439 = vmatpush1.msra.mxu0 0.0
    %2440 = vmatprep.subr.mxu0 0.0
    %2441 = vmatpush1.msra.mxu0 0.0
    %2442 = vmatprep.subr.mxu0 0.0
    %2443 = vmatpush1.msra.mxu0 0.0
    %2444 = vmatprep.subr.mxu0 0.0
    %2445 = vmatpush1.msra.mxu0 0.0
    %2446 = vmatprep.subr.mxu0 0.0
    %2447 = vmatpush1.msra.mxu0 0.0
    %2448 = vmatprep.subr.mxu0 0.0
    %2449 = vmatpush1.msra.mxu0 0.0
    %2450 = vmatprep.subr.mxu0 0.0
    %2451 = vmatpush1.msra.mxu0 0.0
    %2452 = vmatprep.subr.mxu0 0.0
    %2453 = vmatpush1.msra.mxu0 0.0
    %2454 = vmatprep.subr.mxu0 0.0
    %2455 = vmatpush1.msra.mxu0 0.0
    %2456 = vmatprep.subr.mxu0 0.0
    %2457 = vmatpush1.msra.mxu0 0.0
    %2458 = vmatprep.subr.mxu0 0.0
    %2459 = vmatpush1.msra.mxu0 0.0
    %2460 = vmatprep.subr.mxu0 0.0
    %2461 = vmatpush1.msra.mxu0 %v2429
    %2462 = vmatprep.subr.mxu0 0.0
    %2463 = vmatpush2.msra.mxu0 0.0
    %2464 = vmatprep.subr.mxu0 0.0
    %2465 = vmatpush2.msra.mxu0 0.0
    %2466 = vmatprep.subr.mxu0 0.0
    %2467 = vmatpush2.msra.mxu0 0.0
    %2468 = vmatprep.subr.mxu0 0.0
    %2469 = vmatpush2.msra.mxu0 0.0
    %2470 = vmatprep.subr.mxu0 0.0
    %2471 = vmatpush2.msra.mxu0 0.0
    %2472 = vmatprep.subr.mxu0 0.0
    %2473 = vmatpush2.msra.mxu0 0.0
    %2474 = vmatprep.subr.mxu0 0.0
    %2475 = vmatpush2.msra.mxu0 0.0
    %2476 = vmatprep.subr.mxu0 0.0
    %2477 = vmatpush2.msra.mxu0 0.0
    %2478 = vmatprep.subr.mxu0 0.0
    %2479 = vmatpush2.msra.mxu0 0.0
    %2480 = vmatprep.subr.mxu0 0.0
    %2481 = vmatpush2.msra.mxu0 0.0
    %2482 = vmatprep.subr.mxu0 0.0
    %2483 = vmatpush2.msra.mxu0 0.0
    %2484 = vmatprep.subr.mxu0 0.0
    %2485 = vmatpush2.msra.mxu0 0.0
    %2486 = vmatprep.subr.mxu0 0.0
    %2487 = vmatpush2.msra.mxu0 0.0
    %2488 = vmatprep.subr.mxu0 0.0
    %2489 = vmatpush2.msra.mxu0 0.0
    %2490 = vmatprep.subr.mxu0 0.0
    %2491 = vmatpush2.msra.mxu0 0.0
    %2492 = vmatprep.subr.mxu0 0.0
    %2493 = vmatpush2.msra.mxu0 0.0
    %2494 = vmatprep.mubr.f32.mxu0 0.0
    %2495 = vmatmul.mubr.f32.gmra.mxu0 %v1354
    %v2496 = vpop.f32.mrf.mxu0
    %v2497 = vadd.f32 %v1346, %v2496
    %v2498 = vpop.f32.mrf.mxu0
    %2499 = vmatprep.mubr.f32.mxu0 0.0
    %2500 = vmatmul.mubr.f32.gmra.mxu0 %v1357
    %v2501 = vpop.f32.mrf.mxu0
    %v2502 = vadd.f32 %v1351, %v2501
    %v2503 = vpop.f32.mrf.mxu0
    %2504 = vdwg.mxu0
    %v2505 = vxor.u32 %v2502, 2147483648
    %v2506 = vmul.f32 %v2505, 1.442695
    %v2507 = vpow.pop %v2506
    %v2508 = vadd.f32 %v2507, 1.0
    %v2509 = vrcp.pop %v2508
    %v2510 = vmul.f32 1.0, %v2509
    %v2511 = vmul.f32 %v2497, %v2510
    %2512 = vrot.lane.b32.xlu0 %v2511, 1
    %v2513 = vpop.permute.xlu0 %2512
    %v2514 = vsel %vm1444, %v2513, 0.0
    %2515 = vrot.lane.b32.xlu0 %v2511, 127
    %v2516 = vpop.permute.xlu0 %2515
    %v2517 = vsel %vm1449, %v2516, 0.0
    %v2518 = vmul.f32 %v1453, %v2514
    %v2519 = vmul.f32 %v1458, %v2511
    %v2520 = vadd.f32 %v2518, %v2519
    %v2521 = vmul.f32 %v1464, %v2517
    %v2522 = vadd.f32 %v2520, %v2521
    %v2523 = vadd.f32 %v2522, %v1470
    %v2524 = vmax.f32 %v2523, 0.0
    %v2525 = vmin.f32 %v2523, 0.0
    %v2526 = vmul.f32 %v1477, %v2525
    %v2527 = vadd.f32 %v2524, %v2526
    %2528 = vmatprep.subr.mxu0 0.0
    %2529 = vmatpush1.msra.mxu0 0.0
    %2530 = vmatprep.subr.mxu0 0.0
    %2531 = vmatpush1.msra.mxu0 0.0
    %2532 = vmatprep.subr.mxu0 0.0
    %2533 = vmatpush1.msra.mxu0 0.0
    %2534 = vmatprep.subr.mxu0 0.0
    %2535 = vmatpush1.msra.mxu0 0.0
    %2536 = vmatprep.subr.mxu0 0.0
    %2537 = vmatpush1.msra.mxu0 0.0
    %2538 = vmatprep.subr.mxu0 0.0
    %2539 = vmatpush1.msra.mxu0 0.0
    %2540 = vmatprep.subr.mxu0 0.0
    %2541 = vmatpush1.msra.mxu0 0.0
    %2542 = vmatprep.subr.mxu0 0.0
    %2543 = vmatpush1.msra.mxu0 0.0
    %2544 = vmatprep.subr.mxu0 0.0
    %2545 = vmatpush1.msra.mxu0 0.0
    %2546 = vmatprep.subr.mxu0 0.0
    %2547 = vmatpush1.msra.mxu0 0.0
    %2548 = vmatprep.subr.mxu0 0.0
    %2549 = vmatpush1.msra.mxu0 0.0
    %2550 = vmatprep.subr.mxu0 0.0
    %2551 = vmatpush1.msra.mxu0 0.0
    %2552 = vmatprep.subr.mxu0 0.0
    %2553 = vmatpush1.msra.mxu0 0.0
    %2554 = vmatprep.subr.mxu0 0.0
    %2555 = vmatpush1.msra.mxu0 0.0
    %2556 = vmatprep.subr.mxu0 0.0
    %2557 = vmatpush1.msra.mxu0 0.0
    %2558 = vmatprep.subr.mxu0 0.0
    %2559 = vmatpush1.msra.mxu0 %v2527
    %2560 = vmatprep.subr.mxu0 0.0
    %2561 = vmatpush2.msra.mxu0 0.0
    %2562 = vmatprep.subr.mxu0 0.0
    %2563 = vmatpush2.msra.mxu0 0.0
    %2564 = vmatprep.subr.mxu0 0.0
    %2565 = vmatpush2.msra.mxu0 0.0
    %2566 = vmatprep.subr.mxu0 0.0
    %2567 = vmatpush2.msra.mxu0 0.0
    %2568 = vmatprep.subr.mxu0 0.0
    %2569 = vmatpush2.msra.mxu0 0.0
    %2570 = vmatprep.subr.mxu0 0.0
    %2571 = vmatpush2.msra.mxu0 0.0
    %2572 = vmatprep.subr.mxu0 0.0
    %2573 = vmatpush2.msra.mxu0 0.0
    %2574 = vmatprep.subr.mxu0 0.0
    %2575 = vmatpush2.msra.mxu0 0.0
    %2576 = vmatprep.subr.mxu0 0.0
    %2577 = vmatpush2.msra.mxu0 0.0
    %2578 = vmatprep.subr.mxu0 0.0
    %2579 = vmatpush2.msra.mxu0 0.0
    %2580 = vmatprep.subr.mxu0 0.0
    %2581 = vmatpush2.msra.mxu0 0.0
    %2582 = vmatprep.subr.mxu0 0.0
    %2583 = vmatpush2.msra.mxu0 0.0
    %2584 = vmatprep.subr.mxu0 0.0
    %2585 = vmatpush2.msra.mxu0 0.0
    %2586 = vmatprep.subr.mxu0 0.0
    %2587 = vmatpush2.msra.mxu0 0.0
    %2588 = vmatprep.subr.mxu0 0.0
    %2589 = vmatpush2.msra.mxu0 0.0
    %2590 = vmatprep.subr.mxu0 0.0
    %2591 = vmatpush2.msra.mxu0 0.0
    %2592 = vmatprep.mubr.f32.mxu0 0.0
    %2593 = vmatmul.mubr.f32.gmra.mxu0 %v1490
    %v2594 = vpop.f32.mrf.mxu0
    %v2595 = vadd.f32 %v1483, %v2594
    %v2596 = vpop.f32.mrf.mxu0
    %2597 = vmatprep.mubr.f32.mxu0 0.0
    %2598 = vmatmul.mubr.f32.gmra.mxu0 %v1493
    %v2599 = vpop.f32.mrf.mxu0
    %v2600 = vadd.f32 %v1487, %v2599
    %v2601 = vpop.f32.mrf.mxu0
    %2602 = vdwg.mxu0
    %v2603 = vxor.u32 %v2600, 2147483648
    %v2604 = vmul.f32 %v2603, 1.442695
    %v2605 = vpow.pop %v2604
    %v2606 = vadd.f32 %v2605, 1.0
    %v2607 = vrcp.pop %v2606
    %v2608 = vmul.f32 1.0, %v2607
    %v2609 = vmul.f32 %v2595, %v2608
    %v2610 = vadd.f32 %v2609, %v2429
    %s2611 = scalar_lea.vmem [#allocation2], 8
    %2612 = vst [vmem:[%s2611] sm:$0xff] %v2610
    // Predicated region
    $region10: #{encoder_forward.1} parent=1 // pred_check
      _
    $region11: #{encoder_forward.1} parent=1 // pred_check_branch
      %2614 = sbr.rel (0) target = $region13
    $region12: #{encoder_forward.1} parent=1 // pred_region
      %s2616 = ssub.s32 256, 256
      %2617 = vsyncadd [#allocation3], %s2616
      %s2618 = sshll.u32 [#allocation2], 4
      %s2619 = int_to_ptr.vmem [resolvable:$true] %s2618
      %2624 = dma.vmem_to_hbm [thread:$0]  %s2619, 256, %s2, [#allocation3], 128, 128, 8
    $region13: #{encoder_forward.1} parent=1 // pred_fallthru
      _
    // Predicated region
    $region14: #{encoder_forward.1} parent=1 // pred_check
      _
    $region15: #{encoder_forward.1} parent=1 // pred_check_branch
      %2626 = sbr.rel (0) target = $region17
    $region16: #{encoder_forward.1} parent=1 // pred_region
      %2627 = dma.done [#allocation3], 256
    $region17: #{encoder_forward.1} parent=1 // pred_fallthru
      _
    %2628 = vsyncpa [#allocation3], 1

</llo_original>
